<compile_context>
chip_gen: v7x
topology: tpu7x:2x2x1
jax: 0.10.0
libtpu: 0.0.40
codegen_flags: <defaults>
</compile_context>

<pallas_src>
import functools

import jax
import jax.numpy as jnp
from jax.experimental import pallas as pl
from jax.experimental.pallas import tpu as pltpu

# ----- small, module-consistent config -----
B = 2                       # batch (clips) for the module-consistent check
T = 8                       # num_frames
C, H, W = 3, 8, 8           # target_frame_size scaled down -> (8, 8)
D_IN = C * H * W            # 3 * 8 * 8 = 192  (input_dim of frame_encoder)
E = 128                     # vision_embed_dim (scaled down, divisible by num_heads)
NUM_HEADS = 4
HEAD_DIM = E // NUM_HEADS   # 32
F_DIM = 64                  # fusion_embed_dim (scaled down)
F_PAD = 128                 # fusion dim zero-padded to a full lane width


# --------------------------------------------------------------------------
# Single fused kernel:
#   frame encoder -> fused QKV -> per-head batched attention -> mean pool
#   -> fused (out_proj @ output_proj) matmul
# --------------------------------------------------------------------------
def _fused_encoder_kernel(x_ref, fe_w_ref, fe_b_ref, w_qkv_ref, b_qkv_ref,
                          w_f_ref, b_f_ref, o_ref, *, batch, frames):
    bf16 = jnp.bfloat16

    # ---- 1) frame encoder: relu(x @ W + b); Dropout(0.1) is identity in eval ----
    x = x_ref[...].astype(bf16)                                        # (B*T, D_IN)
    emb = jnp.dot(x, fe_w_ref[...],
                  preferred_element_type=jnp.float32) + fe_b_ref[...]  # (B*T, E) f32
    emb = jnp.maximum(emb, 0.0)

    # ---- 2) fused QKV projection, one wide bf16 MXU matmul over the full batch ----
    #         (1/sqrt(HEAD_DIM) already folded into the q columns of the weights)
    qkv = jnp.dot(emb.astype(bf16), w_qkv_ref[...],
                  preferred_element_type=jnp.float32) + b_qkv_ref[...]  # (B*T, 3E)
    qkv = qkv.reshape(batch, frames, 3 * E)                             # (B, T, 3E)

    # ---- 3) multi-head self-attention, batched over clips; static loop over heads ----
    pooled_heads = []
    for h in range(NUM_HEADS):                                          # static unroll (4)
        c0 = h * HEAD_DIM
        qh = qkv[:, :, c0:c0 + HEAD_DIM]                                # (B, T, D)
        kh = qkv[:, :, E + c0:E + c0 + HEAD_DIM]
        vh = qkv[:, :, 2 * E + c0:2 * E + c0 + HEAD_DIM]

        # scores: contract the last dim of both operands, leading batch dim only
        s = jnp.einsum('btd,bsd->bts', qh.astype(bf16), kh.astype(bf16),
                       preferred_element_type=jnp.float32)              # (B, T, T)
        s = s - jnp.max(s, axis=-1, keepdims=True)
        p = jnp.exp(s)
        denom = jnp.sum(p, axis=-1, keepdims=True)
        p = p * pl.reciprocal(denom, approx=False)                      # exact

        ctx = jnp.einsum('bts,bsd->btd', p.astype(bf16), vh.astype(bf16),
                         preferred_element_type=jnp.float32)            # (B, T, D)
        pooled_heads.append(jnp.mean(ctx, axis=1))                      # (B, D)

    # pooled context in the original head-concat column order
    pooled = jnp.concatenate(pooled_heads, axis=-1)                     # (B, E) f32

    # ---- 4) fused projection: (wo @ op_w) with biases folded; lane-dense (pad to 128) ----
    out = jnp.dot(pooled.astype(bf16), w_f_ref[...],
                  preferred_element_type=jnp.float32) + b_f_ref[...]    # (B, F_PAD)
    o_ref[...] = out


def temporal_video_encoder_forward(video_frames, kparams):
    """video_frames: (B, T, C, H, W). Any number of clips B per call (amortizes
    launch + weight DMA); the whole batch is resident in VMEM (tiny footprint)."""
    b, t = video_frames.shape[:2]
    assert t == T, f"expected {T} frames, got {t}"
    n = b * t
    x_flat = video_frames.reshape(n, -1).astype(jnp.float32)
    assert x_flat.shape[1] == D_IN

    kernel = functools.partial(_fused_encoder_kernel, batch=b, frames=t)

    out_padded = pl.pallas_call(
        kernel,
        out_shape=jax.ShapeDtypeStruct((b, F_PAD), jnp.float32),
        grid=(1,),
        in_specs=[
            pl.BlockSpec((n, D_IN), lambda i: (0, 0)),        # frames (B*T, D_IN) f32
            pl.BlockSpec((D_IN, E), lambda i: (0, 0)),        # fe_w   bf16
            pl.BlockSpec((1, E), lambda i: (0, 0)),           # fe_b   f32
            pl.BlockSpec((E, 3 * E), lambda i: (0, 0)),       # w_qkv  bf16 (q-scaled)
            pl.BlockSpec((1, 3 * E), lambda i: (0, 0)),       # b_qkv  f32  (q-scaled)
            pl.BlockSpec((E, F_PAD), lambda i: (0, 0)),       # w_f = wo@op_w, padded, bf16
            pl.BlockSpec((1, F_PAD), lambda i: (0, 0)),       # b_f = bo@op_w+op_b, padded, f32
        ],
        out_specs=pl.BlockSpec((b, F_PAD), lambda i: (0, 0)),
        compiler_params=pltpu.CompilerParams(dimension_semantics=("arbitrary",)),
    )(x_flat, kparams["fe_w"], kparams["fe_b"], kparams["w_qkv"], kparams["b_qkv"],
      kparams["w_f"], kparams["b_f"])

    return out_padded[:, :F_DIM]


# --------------------------------------------------------------------------
# Parameter handling
# --------------------------------------------------------------------------
def init_raw_params(key):
    """PyTorch-layout (pre-transposed to (in, out)) f32 parameters."""
    ks = jax.random.split(key, 8)
    s = 0.1
    return {
        "fe_w": jax.random.normal(ks[0], (D_IN, E), jnp.float32) * s,
        "fe_b": jax.random.normal(ks[1], (1, E), jnp.float32) * s,
        # in_proj_weight.T with columns ordered [q | k | v]
        "w_qkv": jax.random.normal(ks[2], (E, 3 * E), jnp.float32) * s,
        "b_qkv": jax.random.normal(ks[3], (1, 3 * E), jnp.float32) * s,
        "wo": jax.random.normal(ks[4], (E, E), jnp.float32) * s,
        "bo": jax.random.normal(ks[5], (1, E), jnp.float32) * s,
        "op_w": jax.random.normal(ks[6], (E, F_DIM), jnp.float32) * s,
        "op_b": jax.random.normal(ks[7], (1, F_DIM), jnp.float32) * s,
    }


def prepare_kernel_params(raw):
    """One-time transforms (eval-mode only, since dropouts must be identity):
       - fold 1/sqrt(HEAD_DIM) into the q columns of the QKV projection,
       - fuse out_proj and output_proj: W_f = wo @ op_w, b_f = bo @ op_w + op_b,
       - zero-pad the fused projection to a full 128-lane output,
       - store weights in bf16 (biases stay f32, added after f32 accumulation)."""
    scale = 1.0 / jnp.sqrt(jnp.float32(HEAD_DIM))
    w_qkv = raw["w_qkv"].at[:, :E].multiply(scale)
    b_qkv = raw["b_qkv"].at[:, :E].multiply(scale)

    w_f = raw["wo"] @ raw["op_w"]                     # (E, F_DIM), computed in f32
    b_f = raw["bo"] @ raw["op_w"] + raw["op_b"]       # (1, F_DIM)
    w_f_pad = jnp.zeros((E, F_PAD), jnp.float32).at[:, :F_DIM].set(w_f)
    b_f_pad = jnp.zeros((1, F_PAD), jnp.float32).at[:, :F_DIM].set(b_f)

    return {
        "fe_w": raw["fe_w"].astype(jnp.bfloat16),
        "fe_b": raw["fe_b"].astype(jnp.float32),
        "w_qkv": w_qkv.astype(jnp.bfloat16),
        "b_qkv": b_qkv.astype(jnp.float32),
        "w_f": w_f_pad.astype(jnp.bfloat16),
        "b_f": b_f_pad.astype(jnp.float32),
    }


# --------------------------------------------------------------------------
# Pure-JAX f32 reference (PyTorch eval-mode semantics, original un-fused params)
# --------------------------------------------------------------------------
def reference_forward(video_frames, raw):
    b, t = video_frames.shape[:2]
    x = video_frames.reshape(b, t, -1)
    emb = jnp.maximum(x @ raw["fe_w"] + raw["fe_b"], 0.0)               # (B, T, E)
    qkv = emb @ raw["w_qkv"] + raw["b_qkv"]                             # (B, T, 3E)
    q, k, v = qkv[..., :E], qkv[..., E:2 * E], qkv[..., 2 * E:]
    q = q.reshape(b, t, NUM_HEADS, HEAD_DIM).transpose(0, 2, 1, 3)
    k = k.reshape(b, t, NUM_HEADS, HEAD_DIM).transpose(0, 2, 1, 3)
    v = v.reshape(b, t, NUM_HEADS, HEAD_DIM).transpose(0, 2, 1, 3)
    s = jnp.einsum("bhqd,bhkd->bhqk", q, k) / jnp.sqrt(jnp.float32(HEAD_DIM))
    p = jax.nn.softmax(s, axis=-1)
    ctx = jnp.einsum("bhqk,bhkd->bhqd", p, v)
    ctx = ctx.transpose(0, 2, 1, 3).reshape(b, t, E)
    attended = ctx @ raw["wo"] + raw["bo"]
    pooled = attended.mean(axis=1)
    return pooled @ raw["op_w"] + raw["op_b"]


if __name__ == "__main__":
    key = jax.random.PRNGKey(0)
    pkey, xkey = jax.random.split(key)
    raw_params = init_raw_params(pkey)
    kparams = prepare_kernel_params(raw_params)

    # --- module-consistent small case: (B, T, C, H, W) = (2, 8, 3, 8, 8) ---
    video_frames = jax.random.normal(xkey, (B, T, C, H, W), jnp.float32)
    out = temporal_video_encoder_forward(video_frames, kparams)
    out = jax.block_until_ready(out)
    assert out.shape == (B, F_DIM), out.shape

    # bf16 weight storage + bf16 MXU inputs -> compare loosely against the f32 reference
    ref = reference_forward(video_frames, raw_params)
    assert jnp.allclose(out, ref, rtol=5e-2, atol=5e-2), (out, ref)

    # --- amortization demo: many clips through the SAME single-kernel call ---
    big_frames = jax.random.normal(jax.random.PRNGKey(1), (16, T, C, H, W), jnp.float32)
    out_big = jax.block_until_ready(temporal_video_encoder_forward(big_frames, kparams))
    assert out_big.shape == (16, F_DIM), out_big.shape
    ref_big = reference_forward(big_frames, raw_params)
    assert jnp.allclose(out_big, ref_big, rtol=5e-2, atol=5e-2)

    print("KERNEL_OK")
</pallas_src>

<mosaic_0001>
module attributes {stable_mosaic.version = 11 : i64} {
  func.func @_fused_encoder_kernel(%arg0: i32, %arg1: memref<16x192xf32, #tpu.memory_space<vmem>>, %arg2: memref<192x128xbf16, #tpu.memory_space<vmem>>, %arg3: memref<1x128xf32, #tpu.memory_space<vmem>>, %arg4: memref<128x384xbf16, #tpu.memory_space<vmem>>, %arg5: memref<1x384xf32, #tpu.memory_space<vmem>>, %arg6: memref<128x128xbf16, #tpu.memory_space<vmem>>, %arg7: memref<1x128xf32, #tpu.memory_space<vmem>>, %arg8: memref<2x128xf32, #tpu.memory_space<vmem>>) attributes {dimension_semantics = [#tpu.dimension_semantics<arbitrary>], iteration_bounds = array<i64: 1>, scalar_prefetch = 0 : i64, scratch_operands = 0 : i64, tpu.core_type = #tpu.core_type<tc>, window_params = [{pipeline_mode = #tpu.pipeline_mode<synchronous>, transform_indices = @transform_0, window_bounds = array<i64: 16, 192>}, {pipeline_mode = #tpu.pipeline_mode<synchronous>, transform_indices = @transform_1, window_bounds = array<i64: 192, 128>}, {pipeline_mode = #tpu.pipeline_mode<synchronous>, transform_indices = @transform_2, window_bounds = array<i64: 1, 128>}, {pipeline_mode = #tpu.pipeline_mode<synchronous>, transform_indices = @transform_3, window_bounds = array<i64: 128, 384>}, {pipeline_mode = #tpu.pipeline_mode<synchronous>, transform_indices = @transform_4, window_bounds = array<i64: 1, 384>}, {pipeline_mode = #tpu.pipeline_mode<synchronous>, transform_indices = @transform_5, window_bounds = array<i64: 128, 128>}, {pipeline_mode = #tpu.pipeline_mode<synchronous>, transform_indices = @transform_6, window_bounds = array<i64: 1, 128>}, {pipeline_mode = #tpu.pipeline_mode<synchronous>, transform_indices = @transform_7, window_bounds = array<i64: 2, 128>}]} {
    %c0 = arith.constant 0 : index
    %c0_0 = arith.constant 0 : index
    %0 = vector.load %arg1[%c0, %c0_0] : memref<16x192xf32, #tpu.memory_space<vmem>>, vector<16x192xf32>
    %1 = arith.truncf %0 : vector<16x192xf32> to vector<16x192xbf16>
    %c0_1 = arith.constant 0 : index
    %c0_2 = arith.constant 0 : index
    %2 = vector.load %arg2[%c0_1, %c0_2] : memref<192x128xbf16, #tpu.memory_space<vmem>>, vector<192x128xbf16>
    %cst = arith.constant dense<0.000000e+00> : vector<16x128xf32>
    %3 = tpu.matmul %1, %2, %cst {dimension_numbers = #tpu.dot_dimension_numbers<[1], [0], [0], [1], [0, 0, 1, 1], [], []>} : vector<16x192xbf16>, vector<192x128xbf16>, vector<16x128xf32> -> vector<16x128xf32>
    %c0_3 = arith.constant 0 : index
    %c0_4 = arith.constant 0 : index
    %4 = vector.load %arg3[%c0_3, %c0_4] : memref<1x128xf32, #tpu.memory_space<vmem>>, vector<1x128xf32>
    %5 = vector.broadcast %4 : vector<1x128xf32> to vector<16x128xf32>
    %6 = arith.addf %3, %5 : vector<16x128xf32>
    %cst_5 = arith.constant 0.000000e+00 : f32
    %7 = vector.broadcast %cst_5 : f32 to vector<16x128xf32>
    %8 = arith.maximumf %6, %7 : vector<16x128xf32>
    %9 = arith.truncf %8 : vector<16x128xf32> to vector<16x128xbf16>
    %c0_6 = arith.constant 0 : index
    %c0_7 = arith.constant 0 : index
    %10 = vector.load %arg4[%c0_6, %c0_7] : memref<128x384xbf16, #tpu.memory_space<vmem>>, vector<128x384xbf16>
    %cst_8 = arith.constant dense<0.000000e+00> : vector<16x384xf32>
    %11 = tpu.matmul %9, %10, %cst_8 {dimension_numbers = #tpu.dot_dimension_numbers<[1], [0], [0], [1], [0, 0, 1, 1], [], []>} : vector<16x128xbf16>, vector<128x384xbf16>, vector<16x384xf32> -> vector<16x384xf32>
    %c0_9 = arith.constant 0 : index
    %c0_10 = arith.constant 0 : index
    %12 = vector.load %arg5[%c0_9, %c0_10] : memref<1x384xf32, #tpu.memory_space<vmem>>, vector<1x384xf32>
    %13 = vector.broadcast %12 : vector<1x384xf32> to vector<16x384xf32>
    %14 = arith.addf %11, %13 : vector<16x384xf32>
    %15 = vector.shape_cast %14 : vector<16x384xf32> to vector<2x8x384xf32>
    %16 = vector.extract_strided_slice %15 {offsets = [0, 0, 0], sizes = [2, 8, 32], strides = [1, 1, 1]} : vector<2x8x384xf32> to vector<2x8x32xf32>
    %17 = vector.extract_strided_slice %15 {offsets = [0, 0, 128], sizes = [2, 8, 32], strides = [1, 1, 1]} : vector<2x8x384xf32> to vector<2x8x32xf32>
    %18 = vector.extract_strided_slice %15 {offsets = [0, 0, 256], sizes = [2, 8, 32], strides = [1, 1, 1]} : vector<2x8x384xf32> to vector<2x8x32xf32>
    %19 = arith.truncf %16 : vector<2x8x32xf32> to vector<2x8x32xbf16>
    %20 = arith.truncf %17 : vector<2x8x32xf32> to vector<2x8x32xbf16>
    "tpu.trace_start"() <{level = 10 : i32, message = "btd,bsd->bts"}> : () -> ()
    %cst_11 = arith.constant dense<0.000000e+00> : vector<2x8x8xf32>
    %21 = tpu.matmul %19, %20, %cst_11 {dimension_numbers = #tpu.dot_dimension_numbers<[2], [2], [1], [1], [0, 0, 0, 1, 1, 1], [0], [0]>} : vector<2x8x32xbf16>, vector<2x8x32xbf16>, vector<2x8x8xf32> -> vector<2x8x8xf32>
    "tpu.trace_stop"() : () -> ()
    %cst_12 = arith.constant dense<0xFF800000> : vector<2x8xf32>
    %22 = vector.multi_reduction <maximumf>, %21, %cst_12 [2] : vector<2x8x8xf32> to vector<2x8xf32>
    %23 = vector.shape_cast %22 : vector<2x8xf32> to vector<2x8x1xf32>
    %24 = vector.broadcast %23 : vector<2x8x1xf32> to vector<2x8x8xf32>
    %25 = arith.subf %21, %24 : vector<2x8x8xf32>
    %26 = math.exp %25 : vector<2x8x8xf32>
    %cst_13 = arith.constant dense<0.000000e+00> : vector<2x8xf32>
    %27 = vector.multi_reduction <add>, %26, %cst_13 [2] : vector<2x8x8xf32> to vector<2x8xf32>
    %28 = vector.shape_cast %27 : vector<2x8xf32> to vector<2x8x1xf32>
    %29 = tpu.reciprocal %28 : vector<2x8x1xf32> -> vector<2x8x1xf32>
    %30 = vector.broadcast %29 : vector<2x8x1xf32> to vector<2x8x8xf32>
    %31 = arith.mulf %26, %30 : vector<2x8x8xf32>
    %32 = arith.truncf %31 : vector<2x8x8xf32> to vector<2x8x8xbf16>
    %33 = arith.truncf %18 : vector<2x8x32xf32> to vector<2x8x32xbf16>
    "tpu.trace_start"() <{level = 10 : i32, message = "bts,bsd->btd"}> : () -> ()
    %cst_14 = arith.constant dense<0.000000e+00> : vector<2x8x32xf32>
    %34 = tpu.matmul %32, %33, %cst_14 {dimension_numbers = #tpu.dot_dimension_numbers<[2], [1], [1], [2], [0, 0, 0, 1, 1, 2], [0], [0]>} : vector<2x8x8xbf16>, vector<2x8x32xbf16>, vector<2x8x32xf32> -> vector<2x8x32xf32>
    "tpu.trace_stop"() : () -> ()
    %cst_15 = arith.constant dense<0.000000e+00> : vector<2x32xf32>
    %35 = vector.multi_reduction <add>, %34, %cst_15 [1] : vector<2x8x32xf32> to vector<2x32xf32>
    %cst_16 = arith.constant 8.000000e+00 : f32
    %36 = vector.broadcast %cst_16 : f32 to vector<2x32xf32>
    %37 = arith.divf %35, %36 : vector<2x32xf32>
    %38 = vector.extract_strided_slice %15 {offsets = [0, 0, 32], sizes = [2, 8, 32], strides = [1, 1, 1]} : vector<2x8x384xf32> to vector<2x8x32xf32>
    %39 = vector.extract_strided_slice %15 {offsets = [0, 0, 160], sizes = [2, 8, 32], strides = [1, 1, 1]} : vector<2x8x384xf32> to vector<2x8x32xf32>
    %40 = vector.extract_strided_slice %15 {offsets = [0, 0, 288], sizes = [2, 8, 32], strides = [1, 1, 1]} : vector<2x8x384xf32> to vector<2x8x32xf32>
    %41 = arith.truncf %38 : vector<2x8x32xf32> to vector<2x8x32xbf16>
    %42 = arith.truncf %39 : vector<2x8x32xf32> to vector<2x8x32xbf16>
    "tpu.trace_start"() <{level = 10 : i32, message = "btd,bsd->bts"}> : () -> ()
    %cst_17 = arith.constant dense<0.000000e+00> : vector<2x8x8xf32>
    %43 = tpu.matmul %41, %42, %cst_17 {dimension_numbers = #tpu.dot_dimension_numbers<[2], [2], [1], [1], [0, 0, 0, 1, 1, 1], [0], [0]>} : vector<2x8x32xbf16>, vector<2x8x32xbf16>, vector<2x8x8xf32> -> vector<2x8x8xf32>
    "tpu.trace_stop"() : () -> ()
    %cst_18 = arith.constant dense<0xFF800000> : vector<2x8xf32>
    %44 = vector.multi_reduction <maximumf>, %43, %cst_18 [2] : vector<2x8x8xf32> to vector<2x8xf32>
    %45 = vector.shape_cast %44 : vector<2x8xf32> to vector<2x8x1xf32>
    %46 = vector.broadcast %45 : vector<2x8x1xf32> to vector<2x8x8xf32>
    %47 = arith.subf %43, %46 : vector<2x8x8xf32>
    %48 = math.exp %47 : vector<2x8x8xf32>
    %cst_19 = arith.constant dense<0.000000e+00> : vector<2x8xf32>
    %49 = vector.multi_reduction <add>, %48, %cst_19 [2] : vector<2x8x8xf32> to vector<2x8xf32>
    %50 = vector.shape_cast %49 : vector<2x8xf32> to vector<2x8x1xf32>
    %51 = tpu.reciprocal %50 : vector<2x8x1xf32> -> vector<2x8x1xf32>
    %52 = vector.broadcast %51 : vector<2x8x1xf32> to vector<2x8x8xf32>
    %53 = arith.mulf %48, %52 : vector<2x8x8xf32>
    %54 = arith.truncf %53 : vector<2x8x8xf32> to vector<2x8x8xbf16>
    %55 = arith.truncf %40 : vector<2x8x32xf32> to vector<2x8x32xbf16>
    "tpu.trace_start"() <{level = 10 : i32, message = "bts,bsd->btd"}> : () -> ()
    %cst_20 = arith.constant dense<0.000000e+00> : vector<2x8x32xf32>
    %56 = tpu.matmul %54, %55, %cst_20 {dimension_numbers = #tpu.dot_dimension_numbers<[2], [1], [1], [2], [0, 0, 0, 1, 1, 2], [0], [0]>} : vector<2x8x8xbf16>, vector<2x8x32xbf16>, vector<2x8x32xf32> -> vector<2x8x32xf32>
    "tpu.trace_stop"() : () -> ()
    %cst_21 = arith.constant dense<0.000000e+00> : vector<2x32xf32>
    %57 = vector.multi_reduction <add>, %56, %cst_21 [1] : vector<2x8x32xf32> to vector<2x32xf32>
    %cst_22 = arith.constant 8.000000e+00 : f32
    %58 = vector.broadcast %cst_22 : f32 to vector<2x32xf32>
    %59 = arith.divf %57, %58 : vector<2x32xf32>
    %60 = vector.extract_strided_slice %15 {offsets = [0, 0, 64], sizes = [2, 8, 32], strides = [1, 1, 1]} : vector<2x8x384xf32> to vector<2x8x32xf32>
    %61 = vector.extract_strided_slice %15 {offsets = [0, 0, 192], sizes = [2, 8, 32], strides = [1, 1, 1]} : vector<2x8x384xf32> to vector<2x8x32xf32>
    %62 = vector.extract_strided_slice %15 {offsets = [0, 0, 320], sizes = [2, 8, 32], strides = [1, 1, 1]} : vector<2x8x384xf32> to vector<2x8x32xf32>
    %63 = arith.truncf %60 : vector<2x8x32xf32> to vector<2x8x32xbf16>
    %64 = arith.truncf %61 : vector<2x8x32xf32> to vector<2x8x32xbf16>
    "tpu.trace_start"() <{level = 10 : i32, message = "btd,bsd->bts"}> : () -> ()
    %cst_23 = arith.constant dense<0.000000e+00> : vector<2x8x8xf32>
    %65 = tpu.matmul %63, %64, %cst_23 {dimension_numbers = #tpu.dot_dimension_numbers<[2], [2], [1], [1], [0, 0, 0, 1, 1, 1], [0], [0]>} : vector<2x8x32xbf16>, vector<2x8x32xbf16>, vector<2x8x8xf32> -> vector<2x8x8xf32>
    "tpu.trace_stop"() : () -> ()
    %cst_24 = arith.constant dense<0xFF800000> : vector<2x8xf32>
    %66 = vector.multi_reduction <maximumf>, %65, %cst_24 [2] : vector<2x8x8xf32> to vector<2x8xf32>
    %67 = vector.shape_cast %66 : vector<2x8xf32> to vector<2x8x1xf32>
    %68 = vector.broadcast %67 : vector<2x8x1xf32> to vector<2x8x8xf32>
    %69 = arith.subf %65, %68 : vector<2x8x8xf32>
    %70 = math.exp %69 : vector<2x8x8xf32>
    %cst_25 = arith.constant dense<0.000000e+00> : vector<2x8xf32>
    %71 = vector.multi_reduction <add>, %70, %cst_25 [2] : vector<2x8x8xf32> to vector<2x8xf32>
    %72 = vector.shape_cast %71 : vector<2x8xf32> to vector<2x8x1xf32>
    %73 = tpu.reciprocal %72 : vector<2x8x1xf32> -> vector<2x8x1xf32>
    %74 = vector.broadcast %73 : vector<2x8x1xf32> to vector<2x8x8xf32>
    %75 = arith.mulf %70, %74 : vector<2x8x8xf32>
    %76 = arith.truncf %75 : vector<2x8x8xf32> to vector<2x8x8xbf16>
    %77 = arith.truncf %62 : vector<2x8x32xf32> to vector<2x8x32xbf16>
    "tpu.trace_start"() <{level = 10 : i32, message = "bts,bsd->btd"}> : () -> ()
    %cst_26 = arith.constant dense<0.000000e+00> : vector<2x8x32xf32>
    %78 = tpu.matmul %76, %77, %cst_26 {dimension_numbers = #tpu.dot_dimension_numbers<[2], [1], [1], [2], [0, 0, 0, 1, 1, 2], [0], [0]>} : vector<2x8x8xbf16>, vector<2x8x32xbf16>, vector<2x8x32xf32> -> vector<2x8x32xf32>
    "tpu.trace_stop"() : () -> ()
    %cst_27 = arith.constant dense<0.000000e+00> : vector<2x32xf32>
    %79 = vector.multi_reduction <add>, %78, %cst_27 [1] : vector<2x8x32xf32> to vector<2x32xf32>
    %cst_28 = arith.constant 8.000000e+00 : f32
    %80 = vector.broadcast %cst_28 : f32 to vector<2x32xf32>
    %81 = arith.divf %79, %80 : vector<2x32xf32>
    %82 = vector.extract_strided_slice %15 {offsets = [0, 0, 96], sizes = [2, 8, 32], strides = [1, 1, 1]} : vector<2x8x384xf32> to vector<2x8x32xf32>
    %83 = vector.extract_strided_slice %15 {offsets = [0, 0, 224], sizes = [2, 8, 32], strides = [1, 1, 1]} : vector<2x8x384xf32> to vector<2x8x32xf32>
    %84 = vector.extract_strided_slice %15 {offsets = [0, 0, 352], sizes = [2, 8, 32], strides = [1, 1, 1]} : vector<2x8x384xf32> to vector<2x8x32xf32>
    %85 = arith.truncf %82 : vector<2x8x32xf32> to vector<2x8x32xbf16>
    %86 = arith.truncf %83 : vector<2x8x32xf32> to vector<2x8x32xbf16>
    "tpu.trace_start"() <{level = 10 : i32, message = "btd,bsd->bts"}> : () -> ()
    %cst_29 = arith.constant dense<0.000000e+00> : vector<2x8x8xf32>
    %87 = tpu.matmul %85, %86, %cst_29 {dimension_numbers = #tpu.dot_dimension_numbers<[2], [2], [1], [1], [0, 0, 0, 1, 1, 1], [0], [0]>} : vector<2x8x32xbf16>, vector<2x8x32xbf16>, vector<2x8x8xf32> -> vector<2x8x8xf32>
    "tpu.trace_stop"() : () -> ()
    %cst_30 = arith.constant dense<0xFF800000> : vector<2x8xf32>
    %88 = vector.multi_reduction <maximumf>, %87, %cst_30 [2] : vector<2x8x8xf32> to vector<2x8xf32>
    %89 = vector.shape_cast %88 : vector<2x8xf32> to vector<2x8x1xf32>
    %90 = vector.broadcast %89 : vector<2x8x1xf32> to vector<2x8x8xf32>
    %91 = arith.subf %87, %90 : vector<2x8x8xf32>
    %92 = math.exp %91 : vector<2x8x8xf32>
    %cst_31 = arith.constant dense<0.000000e+00> : vector<2x8xf32>
    %93 = vector.multi_reduction <add>, %92, %cst_31 [2] : vector<2x8x8xf32> to vector<2x8xf32>
    %94 = vector.shape_cast %93 : vector<2x8xf32> to vector<2x8x1xf32>
    %95 = tpu.reciprocal %94 : vector<2x8x1xf32> -> vector<2x8x1xf32>
    %96 = vector.broadcast %95 : vector<2x8x1xf32> to vector<2x8x8xf32>
    %97 = arith.mulf %92, %96 : vector<2x8x8xf32>
    %98 = arith.truncf %97 : vector<2x8x8xf32> to vector<2x8x8xbf16>
    %99 = arith.truncf %84 : vector<2x8x32xf32> to vector<2x8x32xbf16>
    "tpu.trace_start"() <{level = 10 : i32, message = "bts,bsd->btd"}> : () -> ()
    %cst_32 = arith.constant dense<0.000000e+00> : vector<2x8x32xf32>
    %100 = tpu.matmul %98, %99, %cst_32 {dimension_numbers = #tpu.dot_dimension_numbers<[2], [1], [1], [2], [0, 0, 0, 1, 1, 2], [0], [0]>} : vector<2x8x8xbf16>, vector<2x8x32xbf16>, vector<2x8x32xf32> -> vector<2x8x32xf32>
    "tpu.trace_stop"() : () -> ()
    %cst_33 = arith.constant dense<0.000000e+00> : vector<2x32xf32>
    %101 = vector.multi_reduction <add>, %100, %cst_33 [1] : vector<2x8x32xf32> to vector<2x32xf32>
    %cst_34 = arith.constant 8.000000e+00 : f32
    %102 = vector.broadcast %cst_34 : f32 to vector<2x32xf32>
    %103 = arith.divf %101, %102 : vector<2x32xf32>
    %104 = tpu.concatenate %37, %59, %81, %103 in 1 : vector<2x32xf32>, vector<2x32xf32>, vector<2x32xf32>, vector<2x32xf32> -> vector<2x128xf32>
    %105 = arith.truncf %104 : vector<2x128xf32> to vector<2x128xbf16>
    %c0_35 = arith.constant 0 : index
    %c0_36 = arith.constant 0 : index
    %106 = vector.load %arg6[%c0_35, %c0_36] : memref<128x128xbf16, #tpu.memory_space<vmem>>, vector<128x128xbf16>
    %cst_37 = arith.constant dense<0.000000e+00> : vector<2x128xf32>
    %107 = tpu.matmul %105, %106, %cst_37 {dimension_numbers = #tpu.dot_dimension_numbers<[1], [0], [0], [1], [0, 0, 1, 1], [], []>} : vector<2x128xbf16>, vector<128x128xbf16>, vector<2x128xf32> -> vector<2x128xf32>
    %c0_38 = arith.constant 0 : index
    %c0_39 = arith.constant 0 : index
    %108 = vector.load %arg7[%c0_38, %c0_39] : memref<1x128xf32, #tpu.memory_space<vmem>>, vector<1x128xf32>
    %109 = vector.broadcast %108 : vector<1x128xf32> to vector<2x128xf32>
    %110 = arith.addf %107, %109 : vector<2x128xf32>
    %c0_40 = arith.constant 0 : index
    %c0_41 = arith.constant 0 : index
    %111 = vector.load %arg8[%c0_40, %c0_41] : memref<2x128xf32, #tpu.memory_space<vmem>>, vector<2x128xf32>
    tpu.vector_store %arg8[%c0_40, %c0_41], %110 {strides = array<i32>} : memref<2x128xf32, #tpu.memory_space<vmem>>, vector<2x128xf32>,
    return
  }
  func.func @transform_0(%arg0: i32) -> (i32, i32) {
    %c0_i32 = arith.constant 0 : i32
    %c0_i32_0 = arith.constant 0 : i32
    %c0_i32_1 = arith.constant 0 : i32
    return %c0_i32, %c0_i32_0 : i32, i32
  }
  func.func @transform_1(%arg0: i32) -> (i32, i32) {
    %c0_i32 = arith.constant 0 : i32
    %c0_i32_0 = arith.constant 0 : i32
    %c0_i32_1 = arith.constant 0 : i32
    return %c0_i32, %c0_i32_0 : i32, i32
  }
  func.func @transform_2(%arg0: i32) -> (i32, i32) {
    %c0_i32 = arith.constant 0 : i32
    %c0_i32_0 = arith.constant 0 : i32
    %c0_i32_1 = arith.constant 0 : i32
    return %c0_i32, %c0_i32_0 : i32, i32
  }
  func.func @transform_3(%arg0: i32) -> (i32, i32) {
    %c0_i32 = arith.constant 0 : i32
    %c0_i32_0 = arith.constant 0 : i32
    %c0_i32_1 = arith.constant 0 : i32
    return %c0_i32, %c0_i32_0 : i32, i32
  }
  func.func @transform_4(%arg0: i32) -> (i32, i32) {
    %c0_i32 = arith.constant 0 : i32
    %c0_i32_0 = arith.constant 0 : i32
    %c0_i32_1 = arith.constant 0 : i32
    return %c0_i32, %c0_i32_0 : i32, i32
  }
  func.func @transform_5(%arg0: i32) -> (i32, i32) {
    %c0_i32 = arith.constant 0 : i32
    %c0_i32_0 = arith.constant 0 : i32
    %c0_i32_1 = arith.constant 0 : i32
    return %c0_i32, %c0_i32_0 : i32, i32
  }
  func.func @transform_6(%arg0: i32) -> (i32, i32) {
    %c0_i32 = arith.constant 0 : i32
    %c0_i32_0 = arith.constant 0 : i32
    %c0_i32_1 = arith.constant 0 : i32
    return %c0_i32, %c0_i32_0 : i32, i32
  }
  func.func @transform_7(%arg0: i32) -> (i32, i32) {
    %c0_i32 = arith.constant 0 : i32
    %c0_i32_0 = arith.constant 0 : i32
    %c0_i32_1 = arith.constant 0 : i32
    return %c0_i32, %c0_i32_0 : i32, i32
  }
}

</mosaic_0001>

<llo_original>
// kernel: tpu_custom_call.1
$region0: #{tpu_custom_call.1}
  #allocation0 [shape = 'u32[]', space=smem, size = 0x4, offset = 0x4, fixed_abs, tag = 'smem constant byte address 0x4 - core index']
  #allocation1 [shape = 'u32[144,128]{1,0:T(1,128)}', space=vmem, size = 0x12000, scoped, tag = 'internal scratch']
  %s0 = inlined_call_operand.hbm [shape: f32[16,192], index: 0, kind: input, shape index: {}]
  %s1 = inlined_call_operand.hbm [shape: bf16[192,128], index: 1, kind: input, shape index: {}]
  %s2 = inlined_call_operand.vmem [shape: f32[1,128], index: 2, kind: input, shape index: {}]
  %s3 = inlined_call_operand.hbm [shape: bf16[128,384], index: 3, kind: input, shape index: {}]
  %s4 = inlined_call_operand.vmem [shape: f32[1,384], index: 4, kind: input, shape index: {}]
  %s5 = inlined_call_operand.hbm [shape: bf16[128,128], index: 5, kind: input, shape index: {}]
  %s6 = inlined_call_operand.vmem [shape: f32[1,128], index: 6, kind: input, shape index: {}]
  %s7 = inlined_call_operand.hbm [shape: f32[2,128], index: 7, kind: output, shape index: {}]
  %s8 = sld [smem:[#allocation0]]
  $region54: #{tpu_custom_call.1} parent=0
    _
  %s10 = ssub.s32 1, %s8
  %s11 = scalar_select 0, %s10, %s8
  $region1: #{tpu_custom_call.1} parent=0
    #allocation2 [shape = 'u8[16384]{0}', space=vmem, size = 0x4000, scoped, tag = 'input window, operand 0, single buffered']
    #allocation3 [shape = 's32[1]{0}', space=sflag, size = 0x4, scoped, tag = 'scoped memory for tpu_custom_call.1']
    #allocation4 [shape = 's32[1]{0}', space=sflag, size = 0x4, scoped, tag = 'scoped memory for tpu_custom_call.1']
    #allocation5 [shape = 'u8[49152]{0}', space=vmem, size = 0xc000, scoped, tag = 'input window, operand 1, single buffered']
    #allocation6 [shape = 's32[1]{0}', space=sflag, size = 0x4, scoped, tag = 'scoped memory for tpu_custom_call.1']
    #allocation7 [shape = 'u8[98304]{0}', space=vmem, size = 0x18000, scoped, tag = 'input window, operand 3, single buffered']
    #allocation8 [shape = 'u8[32768]{0}', space=vmem, size = 0x8000, scoped, tag = 'input window, operand 5, single buffered']
    #allocation9 [shape = 's32[1]{0}', space=sflag, size = 0x4, scoped, tag = 'scoped memory for tpu_custom_call.1']
    #allocation10 [shape = 'u8[1024]{0}', space=vmem, size = 0x400, scoped, tag = 'output window, operand 0, single buffered']
    %12 = vsyncpa [#allocation3], 0
    %13 = vsyncpa [#allocation6], 0
    %14 = vsyncpa [#allocation9], 0
    %15 = vsyncpa [#allocation4], 0
    // Predicated region
    $region2: #{tpu_custom_call.1} parent=1 // pred_check
      _
    $region3: #{tpu_custom_call.1} parent=1 // pred_check_branch
      %17 = sbr.rel (0) target = $region5
    $region4: #{tpu_custom_call.1} parent=1 // pred_region
      %s19 = ssub.s32 512, 512
      %20 = vsyncadd [#allocation3], %s19
      %s21 = sshll.u32 [#allocation2], 4
      %s22 = int_to_ptr.vmem [resolvable:$true] %s21
      %27 = dma.hbm_to_vmem [thread:$0]  %s0, 512, %s22, [#allocation3], 256, 256, 16
    $region5: #{tpu_custom_call.1} parent=1 // pred_fallthru
      _
    // Predicated region
    $region6: #{tpu_custom_call.1} parent=1 // pred_check
      _
    $region7: #{tpu_custom_call.1} parent=1 // pred_check_branch
      %29 = sbr.rel (0) target = $region9
    $region8: #{tpu_custom_call.1} parent=1 // pred_region
      %s31 = ssub.s32 1536, 1536
      %32 = vsyncadd [#allocation6], %s31
      %s33 = sshll.u32 [#allocation5], 4
      %s34 = int_to_ptr.vmem [resolvable:$true] %s33
      %39 = dma.hbm_to_vmem [thread:$0]  %s1, 1536, %s34, [#allocation6], 64, 64, 4
    $region9: #{tpu_custom_call.1} parent=1 // pred_fallthru
      _
    // Predicated region
    $region10: #{tpu_custom_call.1} parent=1 // pred_check
      _
    $region11: #{tpu_custom_call.1} parent=1 // pred_check_branch
      %41 = sbr.rel (0) target = $region13
    $region12: #{tpu_custom_call.1} parent=1 // pred_region
      _
    $region13: #{tpu_custom_call.1} parent=1 // pred_fallthru
      _
    // Predicated region
    $region14: #{tpu_custom_call.1} parent=1 // pred_check
      _
    $region15: #{tpu_custom_call.1} parent=1 // pred_check_branch
      %43 = sbr.rel (0) target = $region17
    $region16: #{tpu_custom_call.1} parent=1 // pred_region
      %s45 = ssub.s32 3072, 3072
      %46 = vsyncadd [#allocation6], %s45
      %s47 = sshll.u32 [#allocation7], 4
      %s48 = int_to_ptr.vmem [resolvable:$true] %s47
      %53 = dma.hbm_to_vmem [thread:$0]  %s3, 3072, %s48, [#allocation6], 192, 192, 12
    $region17: #{tpu_custom_call.1} parent=1 // pred_fallthru
      _
    // Predicated region
    $region18: #{tpu_custom_call.1} parent=1 // pred_check
      _
    $region19: #{tpu_custom_call.1} parent=1 // pred_check_branch
      %55 = sbr.rel (0) target = $region21
    $region20: #{tpu_custom_call.1} parent=1 // pred_region
      _
    $region21: #{tpu_custom_call.1} parent=1 // pred_fallthru
      _
    // Predicated region
    $region22: #{tpu_custom_call.1} parent=1 // pred_check
      _
    $region23: #{tpu_custom_call.1} parent=1 // pred_check_branch
      %57 = sbr.rel (0) target = $region25
    $region24: #{tpu_custom_call.1} parent=1 // pred_region
      %s59 = ssub.s32 1024, 1024
      %60 = vsyncadd [#allocation9], %s59
      %s61 = sshll.u32 [#allocation8], 4
      %s62 = int_to_ptr.vmem [resolvable:$true] %s61
      %67 = dma.hbm_to_vmem [thread:$0]  %s5, 1024, %s62, [#allocation9], 64, 64, 4
    $region25: #{tpu_custom_call.1} parent=1 // pred_fallthru
      _
    // Predicated region
    $region26: #{tpu_custom_call.1} parent=1 // pred_check
      _
    $region27: #{tpu_custom_call.1} parent=1 // pred_check_branch
      %69 = sbr.rel (0) target = $region29
    $region28: #{tpu_custom_call.1} parent=1 // pred_region
      _
    $region29: #{tpu_custom_call.1} parent=1 // pred_fallthru
      _
    // Predicated region
    $region30: #{tpu_custom_call.1} parent=1 // pred_check
      _
    $region31: #{tpu_custom_call.1} parent=1 // pred_check_branch
      %71 = sbr.rel (0) target = $region33
    $region32: #{tpu_custom_call.1} parent=1 // pred_region
      %72 = dma.done [#allocation3], 512
    $region33: #{tpu_custom_call.1} parent=1 // pred_fallthru
      _
    // Predicated region
    $region34: #{tpu_custom_call.1} parent=1 // pred_check
      _
    $region35: #{tpu_custom_call.1} parent=1 // pred_check_branch
      %74 = sbr.rel (0) target = $region37
    $region36: #{tpu_custom_call.1} parent=1 // pred_region
      %75 = dma.done [#allocation6], 1536
    $region37: #{tpu_custom_call.1} parent=1 // pred_fallthru
      _
    // Predicated region
    $region38: #{tpu_custom_call.1} parent=1 // pred_check
      _
    $region39: #{tpu_custom_call.1} parent=1 // pred_check_branch
      %77 = sbr.rel (0) target = $region41
    $region40: #{tpu_custom_call.1} parent=1 // pred_region
      %78 = dma.done [#allocation6], 3072
    $region41: #{tpu_custom_call.1} parent=1 // pred_fallthru
      _
    // Predicated region
    $region42: #{tpu_custom_call.1} parent=1 // pred_check
      _
    $region43: #{tpu_custom_call.1} parent=1 // pred_check_branch
      %80 = sbr.rel (0) target = $region45
    $region44: #{tpu_custom_call.1} parent=1 // pred_region
      %81 = dma.done [#allocation9], 1024
    $region45: #{tpu_custom_call.1} parent=1 // pred_fallthru
      _
    %v83 = vld [vmem:[#allocation2] sm:$0xff]
    %v84 = vld [vmem:[#allocation2 + $0x8] sm:$0xff]
    %v85 = vld [vmem:[#allocation2 + $0x10] sm:$0xff]
    %v86 = vld [vmem:[#allocation2 + $0x18] sm:$0xff]
    %v87 = vpack.c.bf16 %v85, %v83
    %v88 = vpack.c.bf16 %v86, %v84
    %v89 = vld [vmem:[#allocation5] sm:$0xf]
    %v90 = vld [vmem:[#allocation5 + $0x4] sm:$0xf]
    %v91 = vld [vmem:[#allocation5 + $0x8] sm:$0xf]
    %v92 = vld [vmem:[#allocation5 + $0xc] sm:$0xf]
    %v93 = vld [vmem:[#allocation5 + $0x10] sm:$0xf]
    %v94 = vld [vmem:[#allocation5 + $0x14] sm:$0xf]
    %v95 = vld [vmem:[#allocation5 + $0x18] sm:$0xf]
    %v96 = vld [vmem:[#allocation5 + $0x1c] sm:$0xf]
    %v97 = vld [vmem:[#allocation5 + $0x20] sm:$0xf]
    %v98 = vld [vmem:[#allocation5 + $0x24] sm:$0xf]
    %v99 = vld [vmem:[#allocation5 + $0x28] sm:$0xf]
    %v100 = vld [vmem:[#allocation5 + $0x2c] sm:$0xf]
    %v101 = vld [vmem:[#allocation5 + $0x30] sm:$0xf]
    %v102 = vld [vmem:[#allocation5 + $0x34] sm:$0xf]
    %v103 = vld [vmem:[#allocation5 + $0x38] sm:$0xf]
    %v104 = vld [vmem:[#allocation5 + $0x3c] sm:$0xf]
    %v105 = vld [vmem:[#allocation5 + $0x40] sm:$0xf]
    %v106 = vld [vmem:[#allocation5 + $0x44] sm:$0xf]
    %v107 = vld [vmem:[#allocation5 + $0x48] sm:$0xf]
    %v108 = vld [vmem:[#allocation5 + $0x4c] sm:$0xf]
    %v109 = vld [vmem:[#allocation5 + $0x50] sm:$0xf]
    %v110 = vld [vmem:[#allocation5 + $0x54] sm:$0xf]
    %v111 = vld [vmem:[#allocation5 + $0x58] sm:$0xf]
    %v112 = vld [vmem:[#allocation5 + $0x5c] sm:$0xf]
    %v113 = vld [vmem:[%s2] sm:$0x1]
    %v115 = vlaneseq
    %v116 = vshrl.u32 %v115, 7
    %v117 = vsub.s32 0, %v116
    %v118 = vrot.slane %v113, %v117
    %v144 = vunpack.c.l.b16 %v89
    %v145 = vunpack.c.l.b16 %v90
    %v146 = vunpack.c.l.b16 %v91
    %v147 = vunpack.c.l.b16 %v92
    %v148 = vunpack.c.l.b16 %v93
    %v149 = vunpack.c.l.b16 %v94
    %v150 = vunpack.c.l.b16 %v95
    %v151 = vunpack.c.l.b16 %v96
    %v152 = vunpack.c.l.b16 %v97
    %v153 = vunpack.c.l.b16 %v98
    %v154 = vunpack.c.l.b16 %v99
    %v155 = vunpack.c.l.b16 %v100
    %v156 = vunpack.c.l.b16 %v101
    %v157 = vunpack.c.l.b16 %v102
    %v158 = vunpack.c.l.b16 %v103
    %v159 = vunpack.c.l.b16 %v104
    %v160 = vunpack.c.l.b16 %v105
    %v161 = vunpack.c.l.b16 %v106
    %v162 = vunpack.c.l.b16 %v107
    %v163 = vunpack.c.l.b16 %v108
    %v164 = vunpack.c.l.b16 %v109
    %v165 = vunpack.c.l.b16 %v110
    %v166 = vunpack.c.l.b16 %v111
    %v167 = vunpack.c.l.b16 %v112
    %v168 = vpack.c.b16 %v145, %v144
    %v169 = vpack.c.b16 %v147, %v146
    %v170 = vpack.c.b16 %v149, %v148
    %v171 = vpack.c.b16 %v151, %v150
    %v172 = vpack.c.b16 %v153, %v152
    %v173 = vpack.c.b16 %v155, %v154
    %v174 = vpack.c.b16 %v157, %v156
    %v175 = vpack.c.b16 %v159, %v158
    %v176 = vpack.c.b16 %v161, %v160
    %v177 = vpack.c.b16 %v163, %v162
    %v178 = vpack.c.b16 %v165, %v164
    %v179 = vpack.c.b16 %v167, %v166
    %vm192 = vcmask 523264
    %v194 = vsel %vm192, %v88, 0
    %196 = vmatprep.subr.bf16.mxu0 0
    %197 = vmatpush1.bf16.msra.mxu0 %v168
    %198 = vmatprep.subr.bf16.mxu0 0
    %199 = vmatpush1.bf16.msra.mxu0 %v169
    %200 = vmatprep.subr.bf16.mxu0 0
    %201 = vmatpush1.bf16.msra.mxu0 %v170
    %202 = vmatprep.subr.bf16.mxu0 0
    %203 = vmatpush1.bf16.msra.mxu0 %v171
    %204 = vmatprep.subr.bf16.mxu0 0
    %205 = vmatpush1.bf16.msra.mxu0 %v172
    %206 = vmatprep.subr.bf16.mxu0 0
    %207 = vmatpush1.bf16.msra.mxu0 %v173
    %208 = vmatprep.subr.bf16.mxu0 0
    %209 = vmatpush1.bf16.msra.mxu0 %v174
    %210 = vmatprep.subr.bf16.mxu0 0
    %211 = vmatpush1.bf16.msra.mxu0 %v175
    %212 = vmatprep.subr.bf16.mxu0 0
    %213 = vmatpush1.bf16.msra.mxu0 %v176
    %214 = vmatprep.subr.bf16.mxu0 0
    %215 = vmatpush1.bf16.msra.mxu0 %v177
    %216 = vmatprep.subr.bf16.mxu0 0
    %217 = vmatpush1.bf16.msra.mxu0 %v178
    %218 = vmatprep.subr.bf16.mxu0 0
    %219 = vmatpush1.bf16.msra.mxu0 %v179
    %220 = vmatprep.subr.bf16.mxu0 0
    %221 = vmatpush1.bf16.msra.mxu0 0
    %222 = vmatprep.subr.bf16.mxu0 0
    %223 = vmatpush1.bf16.msra.mxu0 0
    %224 = vmatprep.subr.bf16.mxu0 0
    %225 = vmatpush1.bf16.msra.mxu0 0
    %226 = vmatprep.subr.bf16.mxu0 0
    %227 = vmatpush1.bf16.msra.mxu0 0
    %228 = vmatprep.mubr.bf16.mxu0 %v194
    %229 = vmatmul.mubr.bf16.gmra.mrb[0].mxu0 %v87
    %v230 = vpop.f32.mrb[0].mxu0
    %v231 = vadd.f32 %v118, %v230
    %v232 = vpop.f32.mrb[0].mxu0
    %v233 = vpop.f32.mrb[0].mxu0
    %v234 = vadd.f32 %v118, %v233
    %v235 = vpop.f32.mrb[0].mxu0
    %236 = vdwg.mxu0
    %v237 = vmax.f32 %v231, 0.0
    %v238 = vmax.f32 %v234, 0.0
    %v239 = vpack.c.bf16 %v238, %v237
    %v240 = vld [vmem:[#allocation7] sm:$0xff]
    %v241 = vld [vmem:[#allocation7 + $0x8] sm:$0xf]
    %v242 = vld [vmem:[#allocation7 + $0xc] sm:$0xff]
    %v243 = vld [vmem:[#allocation7 + $0x14] sm:$0xf]
    %v244 = vld [vmem:[#allocation7 + $0x18] sm:$0xff]
    %v245 = vld [vmem:[#allocation7 + $0x20] sm:$0xf]
    %v246 = vld [vmem:[#allocation7 + $0x24] sm:$0xff]
    %v247 = vld [vmem:[#allocation7 + $0x2c] sm:$0xf]
    %v248 = vld [vmem:[#allocation7 + $0x30] sm:$0xff]
    %v249 = vld [vmem:[#allocation7 + $0x38] sm:$0xf]
    %v250 = vld [vmem:[#allocation7 + $0x3c] sm:$0xff]
    %v251 = vld [vmem:[#allocation7 + $0x44] sm:$0xf]
    %v252 = vld [vmem:[#allocation7 + $0x48] sm:$0xff]
    %v253 = vld [vmem:[#allocation7 + $0x50] sm:$0xf]
    %v254 = vld [vmem:[#allocation7 + $0x54] sm:$0xff]
    %v255 = vld [vmem:[#allocation7 + $0x5c] sm:$0xf]
    %v256 = vld [vmem:[#allocation7 + $0x60] sm:$0xff]
    %v257 = vld [vmem:[#allocation7 + $0x68] sm:$0xf]
    %v258 = vld [vmem:[#allocation7 + $0x6c] sm:$0xff]
    %v259 = vld [vmem:[#allocation7 + $0x74] sm:$0xf]
    %v260 = vld [vmem:[#allocation7 + $0x78] sm:$0xff]
    %v261 = vld [vmem:[#allocation7 + $0x80] sm:$0xf]
    %v262 = vld [vmem:[#allocation7 + $0x84] sm:$0xff]
    %v263 = vld [vmem:[#allocation7 + $0x8c] sm:$0xf]
    %v264 = vld [vmem:[#allocation7 + $0x90] sm:$0xff]
    %v265 = vld [vmem:[#allocation7 + $0x98] sm:$0xf]
    %v266 = vld [vmem:[#allocation7 + $0x9c] sm:$0xff]
    %v267 = vld [vmem:[#allocation7 + $0xa4] sm:$0xf]
    %v268 = vld [vmem:[#allocation7 + $0xa8] sm:$0xff]
    %v269 = vld [vmem:[#allocation7 + $0xb0] sm:$0xf]
    %v270 = vld [vmem:[#allocation7 + $0xb4] sm:$0xff]
    %v271 = vld [vmem:[#allocation7 + $0xbc] sm:$0xf]
    %v272 = vld [vmem:[%s4] sm:$0x7]
    %v274 = vlaneseq
    %v275 = vshrl.u32 %v274, 7
    %v276 = vsub.s32 0, %v275
    %v277 = vrot.slane %v272, %v276
    %v278 = vlaneseq
    %v279 = vshrl.u32 %v278, 7
    %v280 = vsub.s32 1, %v279
    %v281 = vrot.slane %v272, %v280
    %v282 = vlaneseq
    %v283 = vshrl.u32 %v282, 7
    %v284 = vsub.s32 2, %v283
    %v285 = vrot.slane %v272, %v284
    %v321 = vunpack.c.l.b16 %v240
    %v322 = vunpack.c.h.b16 %v240
    %v323 = vunpack.c.l.b16 %v241
    %v324 = vunpack.c.l.b16 %v242
    %v325 = vunpack.c.h.b16 %v242
    %v326 = vunpack.c.l.b16 %v243
    %v327 = vunpack.c.l.b16 %v244
    %v328 = vunpack.c.h.b16 %v244
    %v329 = vunpack.c.l.b16 %v245
    %v330 = vunpack.c.l.b16 %v246
    %v331 = vunpack.c.h.b16 %v246
    %v332 = vunpack.c.l.b16 %v247
    %v333 = vunpack.c.l.b16 %v248
    %v334 = vunpack.c.h.b16 %v248
    %v335 = vunpack.c.l.b16 %v249
    %v336 = vunpack.c.l.b16 %v250
    %v337 = vunpack.c.h.b16 %v250
    %v338 = vunpack.c.l.b16 %v251
    %v339 = vunpack.c.l.b16 %v252
    %v340 = vunpack.c.h.b16 %v252
    %v341 = vunpack.c.l.b16 %v253
    %v342 = vunpack.c.l.b16 %v254
    %v343 = vunpack.c.h.b16 %v254
    %v344 = vunpack.c.l.b16 %v255
    %v345 = vunpack.c.l.b16 %v256
    %v346 = vunpack.c.h.b16 %v256
    %v347 = vunpack.c.l.b16 %v257
    %v348 = vunpack.c.l.b16 %v258
    %v349 = vunpack.c.h.b16 %v258
    %v350 = vunpack.c.l.b16 %v259
    %v351 = vunpack.c.l.b16 %v260
    %v352 = vunpack.c.h.b16 %v260
    %v353 = vunpack.c.l.b16 %v261
    %v354 = vunpack.c.l.b16 %v262
    %v355 = vunpack.c.h.b16 %v262
    %v356 = vunpack.c.l.b16 %v263
    %v357 = vunpack.c.l.b16 %v264
    %v358 = vunpack.c.h.b16 %v264
    %v359 = vunpack.c.l.b16 %v265
    %v360 = vunpack.c.l.b16 %v266
    %v361 = vunpack.c.h.b16 %v266
    %v362 = vunpack.c.l.b16 %v267
    %v363 = vunpack.c.l.b16 %v268
    %v364 = vunpack.c.h.b16 %v268
    %v365 = vunpack.c.l.b16 %v269
    %v366 = vunpack.c.l.b16 %v270
    %v367 = vunpack.c.h.b16 %v270
    %v368 = vunpack.c.l.b16 %v271
    %v369 = vpack.c.b16 %v324, %v321
    %v370 = vpack.c.b16 %v325, %v322
    %v371 = vpack.c.b16 %v326, %v323
    %v372 = vpack.c.b16 %v330, %v327
    %v373 = vpack.c.b16 %v331, %v328
    %v374 = vpack.c.b16 %v332, %v329
    %v375 = vpack.c.b16 %v336, %v333
    %v376 = vpack.c.b16 %v337, %v334
    %v377 = vpack.c.b16 %v338, %v335
    %v378 = vpack.c.b16 %v342, %v339
    %v379 = vpack.c.b16 %v343, %v340
    %v380 = vpack.c.b16 %v344, %v341
    %v381 = vpack.c.b16 %v348, %v345
    %v382 = vpack.c.b16 %v349, %v346
    %v383 = vpack.c.b16 %v350, %v347
    %v384 = vpack.c.b16 %v354, %v351
    %v385 = vpack.c.b16 %v355, %v352
    %v386 = vpack.c.b16 %v356, %v353
    %v387 = vpack.c.b16 %v360, %v357
    %v388 = vpack.c.b16 %v361, %v358
    %v389 = vpack.c.b16 %v362, %v359
    %v390 = vpack.c.b16 %v366, %v363
    %v391 = vpack.c.b16 %v367, %v364
    %v392 = vpack.c.b16 %v368, %v365
    %417 = vmatprep.subr.bf16.mxu0 %v370
    %418 = vmatpush1.bf16.msra.mxu0 %v369
    %419 = vmatprep.subr.bf16.mxu0 %v373
    %420 = vmatpush1.bf16.msra.mxu0 %v372
    %421 = vmatprep.subr.bf16.mxu0 %v376
    %422 = vmatpush1.bf16.msra.mxu0 %v375
    %423 = vmatprep.subr.bf16.mxu0 %v379
    %424 = vmatpush1.bf16.msra.mxu0 %v378
    %425 = vmatprep.subr.bf16.mxu0 %v382
    %426 = vmatpush1.bf16.msra.mxu0 %v381
    %427 = vmatprep.subr.bf16.mxu0 %v385
    %428 = vmatpush1.bf16.msra.mxu0 %v384
    %429 = vmatprep.subr.bf16.mxu0 %v388
    %430 = vmatpush1.bf16.msra.mxu0 %v387
    %431 = vmatprep.subr.bf16.mxu0 %v391
    %432 = vmatpush1.bf16.msra.mxu0 %v390
    %433 = vmatprep.subr.bf16.mxu0 0
    %434 = vmatpush1.bf16.msra.mxu0 0
    %435 = vmatprep.subr.bf16.mxu0 0
    %436 = vmatpush1.bf16.msra.mxu0 0
    %437 = vmatprep.subr.bf16.mxu0 0
    %438 = vmatpush1.bf16.msra.mxu0 0
    %439 = vmatprep.subr.bf16.mxu0 0
    %440 = vmatpush1.bf16.msra.mxu0 0
    %441 = vmatprep.subr.bf16.mxu0 0
    %442 = vmatpush1.bf16.msra.mxu0 0
    %443 = vmatprep.subr.bf16.mxu0 0
    %444 = vmatpush1.bf16.msra.mxu0 0
    %445 = vmatprep.subr.bf16.mxu0 0
    %446 = vmatpush1.bf16.msra.mxu0 0
    %447 = vmatprep.subr.bf16.mxu0 0
    %448 = vmatpush1.bf16.msra.mxu0 0
    %449 = vmatprep.mubr.bf16.mxu0 0
    %450 = vmatmul.mubr.bf16.gmra.mrb[0].mxu0 %v239
    %v451 = vpop.f32.mrb[0].mxu0
    %v452 = vadd.f32 %v277, %v451
    %v453 = vpop.f32.mrb[0].mxu0
    %v454 = vadd.f32 %v281, %v453
    %v455 = vpop.f32.mrb[0].mxu0
    %v456 = vadd.f32 %v277, %v455
    %v457 = vpop.f32.mrb[0].mxu0
    %v458 = vadd.f32 %v281, %v457
    %459 = vdwg.mxu0
    %460 = vmatprep.subr.bf16.mxu0 0
    %461 = vmatpush1.bf16.msra.mxu0 %v371
    %462 = vmatprep.subr.bf16.mxu0 0
    %463 = vmatpush1.bf16.msra.mxu0 %v374
    %464 = vmatprep.subr.bf16.mxu0 0
    %465 = vmatpush1.bf16.msra.mxu0 %v377
    %466 = vmatprep.subr.bf16.mxu0 0
    %467 = vmatpush1.bf16.msra.mxu0 %v380
    %468 = vmatprep.subr.bf16.mxu0 0
    %469 = vmatpush1.bf16.msra.mxu0 %v383
    %470 = vmatprep.subr.bf16.mxu0 0
    %471 = vmatpush1.bf16.msra.mxu0 %v386
    %472 = vmatprep.subr.bf16.mxu0 0
    %473 = vmatpush1.bf16.msra.mxu0 %v389
    %474 = vmatprep.subr.bf16.mxu0 0
    %475 = vmatpush1.bf16.msra.mxu0 %v392
    %476 = vmatprep.subr.bf16.mxu0 0
    %477 = vmatpush1.bf16.msra.mxu0 0
    %478 = vmatprep.subr.bf16.mxu0 0
    %479 = vmatpush1.bf16.msra.mxu0 0
    %480 = vmatprep.subr.bf16.mxu0 0
    %481 = vmatpush1.bf16.msra.mxu0 0
    %482 = vmatprep.subr.bf16.mxu0 0
    %483 = vmatpush1.bf16.msra.mxu0 0
    %484 = vmatprep.subr.bf16.mxu0 0
    %485 = vmatpush1.bf16.msra.mxu0 0
    %486 = vmatprep.subr.bf16.mxu0 0
    %487 = vmatpush1.bf16.msra.mxu0 0
    %488 = vmatprep.subr.bf16.mxu0 0
    %489 = vmatpush1.bf16.msra.mxu0 0
    %490 = vmatprep.subr.bf16.mxu0 0
    %491 = vmatpush1.bf16.msra.mxu0 0
    %492 = vmatprep.mubr.bf16.mxu0 0
    %493 = vmatmul.mubr.bf16.gmra.mrb[0].mxu0 %v239
    %v494 = vpop.f32.mrb[0].mxu0
    %v495 = vadd.f32 %v285, %v494
    %v496 = vpop.f32.mrb[0].mxu0
    %v497 = vpop.f32.mrb[0].mxu0
    %v498 = vadd.f32 %v285, %v497
    %v499 = vpop.f32.mrb[0].mxu0
    %500 = vdwg.mxu0
    %v501 = vpack.c.bf16 %v452, %v452
    %v502 = vpack.c.bf16 %v456, %v456
    %v503 = vpack.c.bf16 %v454, %v454
    %v504 = vpack.c.bf16 %v458, %v458
    %vm505 = vcmask 261120
    %v507 = vsel %vm505, %v501, 0
    %v510 = vsel %vm505, %v503, 0
    %512 = vmatprep.subr.bf16.mxu0 0
    %513 = vmatpush1.bf16.xpose.msra.mxu0 %v510
    %514 = vmatprep.subr.bf16.mxu0 0
    %515 = vmatpush1.bf16.xpose.msra.mxu0 0
    %516 = vmatprep.subr.bf16.mxu0 0
    %517 = vmatpush1.bf16.xpose.msra.mxu0 0
    %518 = vmatprep.subr.bf16.mxu0 0
    %519 = vmatpush1.bf16.xpose.msra.mxu0 0
    %520 = vmatprep.subr.bf16.mxu0 0
    %521 = vmatpush1.bf16.xpose.msra.mxu0 0
    %522 = vmatprep.subr.bf16.mxu0 0
    %523 = vmatpush1.bf16.xpose.msra.mxu0 0
    %524 = vmatprep.subr.bf16.mxu0 0
    %525 = vmatpush1.bf16.xpose.msra.mxu0 0
    %526 = vmatprep.subr.bf16.mxu0 0
    %527 = vmatpush1.bf16.xpose.msra.mxu0 0
    %528 = vmatprep.subr.bf16.mxu0 0
    %529 = vmatpush1.bf16.xpose.msra.mxu0 0
    %530 = vmatprep.subr.bf16.mxu0 0
    %531 = vmatpush1.bf16.xpose.msra.mxu0 0
    %532 = vmatprep.subr.bf16.mxu0 0
    %533 = vmatpush1.bf16.xpose.msra.mxu0 0
    %534 = vmatprep.subr.bf16.mxu0 0
    %535 = vmatpush1.bf16.xpose.msra.mxu0 0
    %536 = vmatprep.subr.bf16.mxu0 0
    %537 = vmatpush1.bf16.xpose.msra.mxu0 0
    %538 = vmatprep.subr.bf16.mxu0 0
    %539 = vmatpush1.bf16.xpose.msra.mxu0 0
    %540 = vmatprep.subr.bf16.mxu0 0
    %541 = vmatpush1.bf16.xpose.msra.mxu0 0
    %542 = vmatprep.subr.bf16.mxu0 0
    %543 = vmatpush1.bf16.xpose.msra.mxu0 0
    %544 = vmatprep.mubr.bf16.mxu0 0
    %545 = vmatmul.mubr.bf16.gmra.mrb[0].mxu0 %v507
    %v546 = vpop.f32.mrb[0].mxu0
    %v547 = vadd.f32 0.0, %v546
    %v548 = vpop.f32.mrb[0].mxu0
    %v549 = vpop.f32.mrb[0].mxu0
    %v550 = vpop.f32.mrb[0].mxu0
    %551 = vdwg.mxu0
    %v553 = vsel %vm505, %v502, 0
    %v556 = vsel %vm505, %v504, 0
    %558 = vmatprep.subr.bf16.mxu0 0
    %559 = vmatpush1.bf16.xpose.msra.mxu0 %v556
    %560 = vmatprep.subr.bf16.mxu0 0
    %561 = vmatpush1.bf16.xpose.msra.mxu0 0
    %562 = vmatprep.subr.bf16.mxu0 0
    %563 = vmatpush1.bf16.xpose.msra.mxu0 0
    %564 = vmatprep.subr.bf16.mxu0 0
    %565 = vmatpush1.bf16.xpose.msra.mxu0 0
    %566 = vmatprep.subr.bf16.mxu0 0
    %567 = vmatpush1.bf16.xpose.msra.mxu0 0
    %568 = vmatprep.subr.bf16.mxu0 0
    %569 = vmatpush1.bf16.xpose.msra.mxu0 0
    %570 = vmatprep.subr.bf16.mxu0 0
    %571 = vmatpush1.bf16.xpose.msra.mxu0 0
    %572 = vmatprep.subr.bf16.mxu0 0
    %573 = vmatpush1.bf16.xpose.msra.mxu0 0
    %574 = vmatprep.subr.bf16.mxu0 0
    %575 = vmatpush1.bf16.xpose.msra.mxu0 0
    %576 = vmatprep.subr.bf16.mxu0 0
    %577 = vmatpush1.bf16.xpose.msra.mxu0 0
    %578 = vmatprep.subr.bf16.mxu0 0
    %579 = vmatpush1.bf16.xpose.msra.mxu0 0
    %580 = vmatprep.subr.bf16.mxu0 0
    %581 = vmatpush1.bf16.xpose.msra.mxu0 0
    %582 = vmatprep.subr.bf16.mxu0 0
    %583 = vmatpush1.bf16.xpose.msra.mxu0 0
    %584 = vmatprep.subr.bf16.mxu0 0
    %585 = vmatpush1.bf16.xpose.msra.mxu0 0
    %586 = vmatprep.subr.bf16.mxu0 0
    %587 = vmatpush1.bf16.xpose.msra.mxu0 0
    %588 = vmatprep.subr.bf16.mxu0 0
    %589 = vmatpush1.bf16.xpose.msra.mxu0 0
    %590 = vmatprep.mubr.bf16.mxu0 0
    %591 = vmatmul.mubr.bf16.gmra.mrb[0].mxu0 %v553
    %v592 = vpop.f32.mrb[0].mxu0
    %v593 = vadd.f32 0.0, %v592
    %v594 = vpop.f32.mrb[0].mxu0
    %v595 = vpop.f32.mrb[0].mxu0
    %v596 = vpop.f32.mrb[0].mxu0
    %597 = vdwg.mxu0
    %vm598 = vcmask 64512
    %v599 = vsel %vm598, %v547, -inf
    %600 = vmax.xlane.f32.xlu0 %v599
    %v601 = vpop.xlane.xlu0 %600
    %v602 = vsel %vm598, %v593, -inf
    %603 = vmax.xlane.f32.xlu0 %v602
    %v604 = vpop.xlane.xlu0 %603
    %v605 = vsub.f32 %v547, %v601
    %v606 = vsub.f32 %v593, %v604
    %v607 = vmul.f32 %v605, 1.442695
    %v608 = vpow.pop %v607
    %v609 = vmul.f32 %v606, 1.442695
    %v610 = vpow.pop %v609
    %v611 = vsel %vm598, %v608, 0.0
    %612 = vadd.xlane.f32.xlu0 %v611
    %v613 = vpop.xlane.xlu0 %612
    %v614 = vsel %vm598, %v610, 0.0
    %615 = vadd.xlane.f32.xlu0 %v614
    %v616 = vpop.xlane.xlu0 %615
    %v617 = vrcp.pop %v613
    %v618 = vrcp.pop %v616
    %v619 = vmul.f32 %v608, %v617
    %v620 = vmul.f32 %v610, %v618
    %v621 = vpack.c.bf16 %v619, %v619
    %v622 = vpack.c.bf16 %v620, %v620
    %v623 = vpack.c.bf16 %v495, %v495
    %v624 = vpack.c.bf16 %v498, %v498
    %v626 = vsel %vm598, %v621, 0
    %vm628 = vcmask 1043456
    %v630 = vsel %vm628, %v623, 0
    %632 = vmatprep.subr.bf16.mxu0 0
    %633 = vmatpush1.bf16.msra.mxu0 %v630
    %634 = vmatprep.subr.bf16.mxu0 0
    %635 = vmatpush1.bf16.msra.mxu0 0
    %636 = vmatprep.subr.bf16.mxu0 0
    %637 = vmatpush1.bf16.msra.mxu0 0
    %638 = vmatprep.subr.bf16.mxu0 0
    %639 = vmatpush1.bf16.msra.mxu0 0
    %640 = vmatprep.subr.bf16.mxu0 0
    %641 = vmatpush1.bf16.msra.mxu0 0
    %642 = vmatprep.subr.bf16.mxu0 0
    %643 = vmatpush1.bf16.msra.mxu0 0
    %644 = vmatprep.subr.bf16.mxu0 0
    %645 = vmatpush1.bf16.msra.mxu0 0
    %646 = vmatprep.subr.bf16.mxu0 0
    %647 = vmatpush1.bf16.msra.mxu0 0
    %648 = vmatprep.subr.bf16.mxu0 0
    %649 = vmatpush1.bf16.msra.mxu0 0
    %650 = vmatprep.subr.bf16.mxu0 0
    %651 = vmatpush1.bf16.msra.mxu0 0
    %652 = vmatprep.subr.bf16.mxu0 0
    %653 = vmatpush1.bf16.msra.mxu0 0
    %654 = vmatprep.subr.bf16.mxu0 0
    %655 = vmatpush1.bf16.msra.mxu0 0
    %656 = vmatprep.subr.bf16.mxu0 0
    %657 = vmatpush1.bf16.msra.mxu0 0
    %658 = vmatprep.subr.bf16.mxu0 0
    %659 = vmatpush1.bf16.msra.mxu0 0
    %660 = vmatprep.subr.bf16.mxu0 0
    %661 = vmatpush1.bf16.msra.mxu0 0
    %662 = vmatprep.subr.bf16.mxu0 0
    %663 = vmatpush1.bf16.msra.mxu0 0
    %664 = vmatprep.mubr.bf16.mxu0 0
    %665 = vmatmul.mubr.bf16.gmra.mrb[0].mxu0 %v626
    %v666 = vpop.f32.mrb[0].mxu0
    %v667 = vadd.f32 0.0, %v666
    %v668 = vpop.f32.mrb[0].mxu0
    %v669 = vpop.f32.mrb[0].mxu0
    %v670 = vpop.f32.mrb[0].mxu0
    %671 = vdwg.mxu0
    %v673 = vsel %vm598, %v622, 0
    %v676 = vsel %vm628, %v624, 0
    %678 = vmatprep.subr.bf16.mxu0 0
    %679 = vmatpush1.bf16.msra.mxu0 %v676
    %680 = vmatprep.subr.bf16.mxu0 0
    %681 = vmatpush1.bf16.msra.mxu0 0
    %682 = vmatprep.subr.bf16.mxu0 0
    %683 = vmatpush1.bf16.msra.mxu0 0
    %684 = vmatprep.subr.bf16.mxu0 0
    %685 = vmatpush1.bf16.msra.mxu0 0
    %686 = vmatprep.subr.bf16.mxu0 0
    %687 = vmatpush1.bf16.msra.mxu0 0
    %688 = vmatprep.subr.bf16.mxu0 0
    %689 = vmatpush1.bf16.msra.mxu0 0
    %690 = vmatprep.subr.bf16.mxu0 0
    %691 = vmatpush1.bf16.msra.mxu0 0
    %692 = vmatprep.subr.bf16.mxu0 0
    %693 = vmatpush1.bf16.msra.mxu0 0
    %694 = vmatprep.subr.bf16.mxu0 0
    %695 = vmatpush1.bf16.msra.mxu0 0
    %696 = vmatprep.subr.bf16.mxu0 0
    %697 = vmatpush1.bf16.msra.mxu0 0
    %698 = vmatprep.subr.bf16.mxu0 0
    %699 = vmatpush1.bf16.msra.mxu0 0
    %700 = vmatprep.subr.bf16.mxu0 0
    %701 = vmatpush1.bf16.msra.mxu0 0
    %702 = vmatprep.subr.bf16.mxu0 0
    %703 = vmatpush1.bf16.msra.mxu0 0
    %704 = vmatprep.subr.bf16.mxu0 0
    %705 = vmatpush1.bf16.msra.mxu0 0
    %706 = vmatprep.subr.bf16.mxu0 0
    %707 = vmatpush1.bf16.msra.mxu0 0
    %708 = vmatprep.subr.bf16.mxu0 0
    %709 = vmatpush1.bf16.msra.mxu0 0
    %710 = vmatprep.mubr.bf16.mxu0 0
    %711 = vmatmul.mubr.bf16.gmra.mrb[0].mxu0 %v673
    %v712 = vpop.f32.mrb[0].mxu0
    %v713 = vadd.f32 0.0, %v712
    %v714 = vpop.f32.mrb[0].mxu0
    %v715 = vpop.f32.mrb[0].mxu0
    %v716 = vpop.f32.mrb[0].mxu0
    %717 = vdwg.mxu0
    %v718 = vsel %vm505, %v667, 0.0
    %v719 = vrot.slane %v718, 4
    %v720 = vadd.f32 %v718, %v719
    %v721 = vrot.slane %v720, 2
    %v722 = vadd.f32 %v720, %v721
    %v723 = vrot.slane %v722, 1
    %v724 = vadd.f32 %v722, %v723
    %v725 = vsel %vm505, %v713, 0.0
    %v726 = vrot.slane %v725, 4
    %v727 = vadd.f32 %v725, %v726
    %v728 = vrot.slane %v727, 2
    %v729 = vadd.f32 %v727, %v728
    %v730 = vrot.slane %v729, 1
    %v731 = vadd.f32 %v729, %v730
    %v732 = vrcp.pop 8.0
    %v733 = vmul.f32 %v724, %v732
    %v734 = vmul.f32 %v731, %v732
    %736 = vrot.lane.b32.xlu0 %v501, 96
    %v737 = vpop.permute.xlu0 %736
    %739 = vrot.lane.b32.xlu0 %v503, 96
    %v740 = vpop.permute.xlu0 %739
    %v742 = vsel %vm505, %v737, 0
    %v745 = vsel %vm505, %v740, 0
    %747 = vmatprep.subr.bf16.mxu0 0
    %748 = vmatpush1.bf16.xpose.msra.mxu0 %v745
    %749 = vmatprep.subr.bf16.mxu0 0
    %750 = vmatpush1.bf16.xpose.msra.mxu0 0
    %751 = vmatprep.subr.bf16.mxu0 0
    %752 = vmatpush1.bf16.xpose.msra.mxu0 0
    %753 = vmatprep.subr.bf16.mxu0 0
    %754 = vmatpush1.bf16.xpose.msra.mxu0 0
    %755 = vmatprep.subr.bf16.mxu0 0
    %756 = vmatpush1.bf16.xpose.msra.mxu0 0
    %757 = vmatprep.subr.bf16.mxu0 0
    %758 = vmatpush1.bf16.xpose.msra.mxu0 0
    %759 = vmatprep.subr.bf16.mxu0 0
    %760 = vmatpush1.bf16.xpose.msra.mxu0 0
    %761 = vmatprep.subr.bf16.mxu0 0
    %762 = vmatpush1.bf16.xpose.msra.mxu0 0
    %763 = vmatprep.subr.bf16.mxu0 0
    %764 = vmatpush1.bf16.xpose.msra.mxu0 0
    %765 = vmatprep.subr.bf16.mxu0 0
    %766 = vmatpush1.bf16.xpose.msra.mxu0 0
    %767 = vmatprep.subr.bf16.mxu0 0
    %768 = vmatpush1.bf16.xpose.msra.mxu0 0
    %769 = vmatprep.subr.bf16.mxu0 0
    %770 = vmatpush1.bf16.xpose.msra.mxu0 0
    %771 = vmatprep.subr.bf16.mxu0 0
    %772 = vmatpush1.bf16.xpose.msra.mxu0 0
    %773 = vmatprep.subr.bf16.mxu0 0
    %774 = vmatpush1.bf16.xpose.msra.mxu0 0
    %775 = vmatprep.subr.bf16.mxu0 0
    %776 = vmatpush1.bf16.xpose.msra.mxu0 0
    %777 = vmatprep.subr.bf16.mxu0 0
    %778 = vmatpush1.bf16.xpose.msra.mxu0 0
    %779 = vmatprep.mubr.bf16.mxu0 0
    %780 = vmatmul.mubr.bf16.gmra.mrb[0].mxu0 %v742
    %v781 = vpop.f32.mrb[0].mxu0
    %v782 = vadd.f32 0.0, %v781
    %v783 = vpop.f32.mrb[0].mxu0
    %v784 = vpop.f32.mrb[0].mxu0
    %v785 = vpop.f32.mrb[0].mxu0
    %786 = vdwg.mxu0
    %788 = vrot.lane.b32.xlu0 %v502, 96
    %v789 = vpop.permute.xlu0 %788
    %791 = vrot.lane.b32.xlu0 %v504, 96
    %v792 = vpop.permute.xlu0 %791
    %v794 = vsel %vm505, %v789, 0
    %v797 = vsel %vm505, %v792, 0
    %799 = vmatprep.subr.bf16.mxu0 0
    %800 = vmatpush1.bf16.xpose.msra.mxu0 %v797
    %801 = vmatprep.subr.bf16.mxu0 0
    %802 = vmatpush1.bf16.xpose.msra.mxu0 0
    %803 = vmatprep.subr.bf16.mxu0 0
    %804 = vmatpush1.bf16.xpose.msra.mxu0 0
    %805 = vmatprep.subr.bf16.mxu0 0
    %806 = vmatpush1.bf16.xpose.msra.mxu0 0
    %807 = vmatprep.subr.bf16.mxu0 0
    %808 = vmatpush1.bf16.xpose.msra.mxu0 0
    %809 = vmatprep.subr.bf16.mxu0 0
    %810 = vmatpush1.bf16.xpose.msra.mxu0 0
    %811 = vmatprep.subr.bf16.mxu0 0
    %812 = vmatpush1.bf16.xpose.msra.mxu0 0
    %813 = vmatprep.subr.bf16.mxu0 0
    %814 = vmatpush1.bf16.xpose.msra.mxu0 0
    %815 = vmatprep.subr.bf16.mxu0 0
    %816 = vmatpush1.bf16.xpose.msra.mxu0 0
    %817 = vmatprep.subr.bf16.mxu0 0
    %818 = vmatpush1.bf16.xpose.msra.mxu0 0
    %819 = vmatprep.subr.bf16.mxu0 0
    %820 = vmatpush1.bf16.xpose.msra.mxu0 0
    %821 = vmatprep.subr.bf16.mxu0 0
    %822 = vmatpush1.bf16.xpose.msra.mxu0 0
    %823 = vmatprep.subr.bf16.mxu0 0
    %824 = vmatpush1.bf16.xpose.msra.mxu0 0
    %825 = vmatprep.subr.bf16.mxu0 0
    %826 = vmatpush1.bf16.xpose.msra.mxu0 0
    %827 = vmatprep.subr.bf16.mxu0 0
    %828 = vmatpush1.bf16.xpose.msra.mxu0 0
    %829 = vmatprep.subr.bf16.mxu0 0
    %830 = vmatpush1.bf16.xpose.msra.mxu0 0
    %831 = vmatprep.mubr.bf16.mxu0 0
    %832 = vmatmul.mubr.bf16.gmra.mrb[0].mxu0 %v794
    %v833 = vpop.f32.mrb[0].mxu0
    %v834 = vadd.f32 0.0, %v833
    %v835 = vpop.f32.mrb[0].mxu0
    %v836 = vpop.f32.mrb[0].mxu0
    %v837 = vpop.f32.mrb[0].mxu0
    %838 = vdwg.mxu0
    %v839 = vsel %vm598, %v782, -inf
    %840 = vmax.xlane.f32.xlu0 %v839
    %v841 = vpop.xlane.xlu0 %840
    %v842 = vsel %vm598, %v834, -inf
    %843 = vmax.xlane.f32.xlu0 %v842
    %v844 = vpop.xlane.xlu0 %843
    %v845 = vsub.f32 %v782, %v841
    %v846 = vsub.f32 %v834, %v844
    %v847 = vmul.f32 %v845, 1.442695
    %v848 = vpow.pop %v847
    %v849 = vmul.f32 %v846, 1.442695
    %v850 = vpow.pop %v849
    %v851 = vsel %vm598, %v848, 0.0
    %852 = vadd.xlane.f32.xlu0 %v851
    %v853 = vpop.xlane.xlu0 %852
    %v854 = vsel %vm598, %v850, 0.0
    %855 = vadd.xlane.f32.xlu0 %v854
    %v856 = vpop.xlane.xlu0 %855
    %v857 = vrcp.pop %v853
    %v858 = vrcp.pop %v856
    %v859 = vmul.f32 %v848, %v857
    %v860 = vmul.f32 %v850, %v858
    %v861 = vpack.c.bf16 %v859, %v859
    %v862 = vpack.c.bf16 %v860, %v860
    %864 = vrot.lane.b32.xlu0 %v623, 96
    %v865 = vpop.permute.xlu0 %864
    %v867 = vsel %vm598, %v861, 0
    %v870 = vsel %vm628, %v865, 0
    %872 = vmatprep.subr.bf16.mxu0 0
    %873 = vmatpush1.bf16.msra.mxu0 %v870
    %874 = vmatprep.subr.bf16.mxu0 0
    %875 = vmatpush1.bf16.msra.mxu0 0
    %876 = vmatprep.subr.bf16.mxu0 0
    %877 = vmatpush1.bf16.msra.mxu0 0
    %878 = vmatprep.subr.bf16.mxu0 0
    %879 = vmatpush1.bf16.msra.mxu0 0
    %880 = vmatprep.subr.bf16.mxu0 0
    %881 = vmatpush1.bf16.msra.mxu0 0
    %882 = vmatprep.subr.bf16.mxu0 0
    %883 = vmatpush1.bf16.msra.mxu0 0
    %884 = vmatprep.subr.bf16.mxu0 0
    %885 = vmatpush1.bf16.msra.mxu0 0
    %886 = vmatprep.subr.bf16.mxu0 0
    %887 = vmatpush1.bf16.msra.mxu0 0
    %888 = vmatprep.subr.bf16.mxu0 0
    %889 = vmatpush1.bf16.msra.mxu0 0
    %890 = vmatprep.subr.bf16.mxu0 0
    %891 = vmatpush1.bf16.msra.mxu0 0
    %892 = vmatprep.subr.bf16.mxu0 0
    %893 = vmatpush1.bf16.msra.mxu0 0
    %894 = vmatprep.subr.bf16.mxu0 0
    %895 = vmatpush1.bf16.msra.mxu0 0
    %896 = vmatprep.subr.bf16.mxu0 0
    %897 = vmatpush1.bf16.msra.mxu0 0
    %898 = vmatprep.subr.bf16.mxu0 0
    %899 = vmatpush1.bf16.msra.mxu0 0
    %900 = vmatprep.subr.bf16.mxu0 0
    %901 = vmatpush1.bf16.msra.mxu0 0
    %902 = vmatprep.subr.bf16.mxu0 0
    %903 = vmatpush1.bf16.msra.mxu0 0
    %904 = vmatprep.mubr.bf16.mxu0 0
    %905 = vmatmul.mubr.bf16.gmra.mrb[0].mxu0 %v867
    %v906 = vpop.f32.mrb[0].mxu0
    %v907 = vadd.f32 0.0, %v906
    %v908 = vpop.f32.mrb[0].mxu0
    %v909 = vpop.f32.mrb[0].mxu0
    %v910 = vpop.f32.mrb[0].mxu0
    %911 = vdwg.mxu0
    %913 = vrot.lane.b32.xlu0 %v624, 96
    %v914 = vpop.permute.xlu0 %913
    %v916 = vsel %vm598, %v862, 0
    %v919 = vsel %vm628, %v914, 0
    %921 = vmatprep.subr.bf16.mxu0 0
    %922 = vmatpush1.bf16.msra.mxu0 %v919
    %923 = vmatprep.subr.bf16.mxu0 0
    %924 = vmatpush1.bf16.msra.mxu0 0
    %925 = vmatprep.subr.bf16.mxu0 0
    %926 = vmatpush1.bf16.msra.mxu0 0
    %927 = vmatprep.subr.bf16.mxu0 0
    %928 = vmatpush1.bf16.msra.mxu0 0
    %929 = vmatprep.subr.bf16.mxu0 0
    %930 = vmatpush1.bf16.msra.mxu0 0
    %931 = vmatprep.subr.bf16.mxu0 0
    %932 = vmatpush1.bf16.msra.mxu0 0
    %933 = vmatprep.subr.bf16.mxu0 0
    %934 = vmatpush1.bf16.msra.mxu0 0
    %935 = vmatprep.subr.bf16.mxu0 0
    %936 = vmatpush1.bf16.msra.mxu0 0
    %937 = vmatprep.subr.bf16.mxu0 0
    %938 = vmatpush1.bf16.msra.mxu0 0
    %939 = vmatprep.subr.bf16.mxu0 0
    %940 = vmatpush1.bf16.msra.mxu0 0
    %941 = vmatprep.subr.bf16.mxu0 0
    %942 = vmatpush1.bf16.msra.mxu0 0
    %943 = vmatprep.subr.bf16.mxu0 0
    %944 = vmatpush1.bf16.msra.mxu0 0
    %945 = vmatprep.subr.bf16.mxu0 0
    %946 = vmatpush1.bf16.msra.mxu0 0
    %947 = vmatprep.subr.bf16.mxu0 0
    %948 = vmatpush1.bf16.msra.mxu0 0
    %949 = vmatprep.subr.bf16.mxu0 0
    %950 = vmatpush1.bf16.msra.mxu0 0
    %951 = vmatprep.subr.bf16.mxu0 0
    %952 = vmatpush1.bf16.msra.mxu0 0
    %953 = vmatprep.mubr.bf16.mxu0 0
    %954 = vmatmul.mubr.bf16.gmra.mrb[0].mxu0 %v916
    %v955 = vpop.f32.mrb[0].mxu0
    %v956 = vadd.f32 0.0, %v955
    %v957 = vpop.f32.mrb[0].mxu0
    %v958 = vpop.f32.mrb[0].mxu0
    %v959 = vpop.f32.mrb[0].mxu0
    %960 = vdwg.mxu0
    %v961 = vsel %vm505, %v907, 0.0
    %v962 = vrot.slane %v961, 4
    %v963 = vadd.f32 %v961, %v962
    %v964 = vrot.slane %v963, 2
    %v965 = vadd.f32 %v963, %v964
    %v966 = vrot.slane %v965, 1
    %v967 = vadd.f32 %v965, %v966
    %v968 = vsel %vm505, %v956, 0.0
    %v969 = vrot.slane %v968, 4
    %v970 = vadd.f32 %v968, %v969
    %v971 = vrot.slane %v970, 2
    %v972 = vadd.f32 %v970, %v971
    %v973 = vrot.slane %v972, 1
    %v974 = vadd.f32 %v972, %v973
    %v975 = vmul.f32 %v967, %v732
    %v976 = vmul.f32 %v974, %v732
    %977 = vrot.lane.b32.xlu0 %v501, 64
    %v978 = vpop.permute.xlu0 %977
    %979 = vrot.lane.b32.xlu0 %v503, 64
    %v980 = vpop.permute.xlu0 %979
    %v982 = vsel %vm505, %v978, 0
    %v985 = vsel %vm505, %v980, 0
    %987 = vmatprep.subr.bf16.mxu0 0
    %988 = vmatpush1.bf16.xpose.msra.mxu0 %v985
    %989 = vmatprep.subr.bf16.mxu0 0
    %990 = vmatpush1.bf16.xpose.msra.mxu0 0
    %991 = vmatprep.subr.bf16.mxu0 0
    %992 = vmatpush1.bf16.xpose.msra.mxu0 0
    %993 = vmatprep.subr.bf16.mxu0 0
    %994 = vmatpush1.bf16.xpose.msra.mxu0 0
    %995 = vmatprep.subr.bf16.mxu0 0
    %996 = vmatpush1.bf16.xpose.msra.mxu0 0
    %997 = vmatprep.subr.bf16.mxu0 0
    %998 = vmatpush1.bf16.xpose.msra.mxu0 0
    %999 = vmatprep.subr.bf16.mxu0 0
    %1000 = vmatpush1.bf16.xpose.msra.mxu0 0
    %1001 = vmatprep.subr.bf16.mxu0 0
    %1002 = vmatpush1.bf16.xpose.msra.mxu0 0
    %1003 = vmatprep.subr.bf16.mxu0 0
    %1004 = vmatpush1.bf16.xpose.msra.mxu0 0
    %1005 = vmatprep.subr.bf16.mxu0 0
    %1006 = vmatpush1.bf16.xpose.msra.mxu0 0
    %1007 = vmatprep.subr.bf16.mxu0 0
    %1008 = vmatpush1.bf16.xpose.msra.mxu0 0
    %1009 = vmatprep.subr.bf16.mxu0 0
    %1010 = vmatpush1.bf16.xpose.msra.mxu0 0
    %1011 = vmatprep.subr.bf16.mxu0 0
    %1012 = vmatpush1.bf16.xpose.msra.mxu0 0
    %1013 = vmatprep.subr.bf16.mxu0 0
    %1014 = vmatpush1.bf16.xpose.msra.mxu0 0
    %1015 = vmatprep.subr.bf16.mxu0 0
    %1016 = vmatpush1.bf16.xpose.msra.mxu0 0
    %1017 = vmatprep.subr.bf16.mxu0 0
    %1018 = vmatpush1.bf16.xpose.msra.mxu0 0
    %1019 = vmatprep.mubr.bf16.mxu0 0
    %1020 = vmatmul.mubr.bf16.gmra.mrb[0].mxu0 %v982
    %v1021 = vpop.f32.mrb[0].mxu0
    %v1022 = vadd.f32 0.0, %v1021
    %v1023 = vpop.f32.mrb[0].mxu0
    %v1024 = vpop.f32.mrb[0].mxu0
    %v1025 = vpop.f32.mrb[0].mxu0
    %1026 = vdwg.mxu0
    %1027 = vrot.lane.b32.xlu0 %v502, 64
    %v1028 = vpop.permute.xlu0 %1027
    %1029 = vrot.lane.b32.xlu0 %v504, 64
    %v1030 = vpop.permute.xlu0 %1029
    %v1032 = vsel %vm505, %v1028, 0
    %v1035 = vsel %vm505, %v1030, 0
    %1037 = vmatprep.subr.bf16.mxu0 0
    %1038 = vmatpush1.bf16.xpose.msra.mxu0 %v1035
    %1039 = vmatprep.subr.bf16.mxu0 0
    %1040 = vmatpush1.bf16.xpose.msra.mxu0 0
    %1041 = vmatprep.subr.bf16.mxu0 0
    %1042 = vmatpush1.bf16.xpose.msra.mxu0 0
    %1043 = vmatprep.subr.bf16.mxu0 0
    %1044 = vmatpush1.bf16.xpose.msra.mxu0 0
    %1045 = vmatprep.subr.bf16.mxu0 0
    %1046 = vmatpush1.bf16.xpose.msra.mxu0 0
    %1047 = vmatprep.subr.bf16.mxu0 0
    %1048 = vmatpush1.bf16.xpose.msra.mxu0 0
    %1049 = vmatprep.subr.bf16.mxu0 0
    %1050 = vmatpush1.bf16.xpose.msra.mxu0 0
    %1051 = vmatprep.subr.bf16.mxu0 0
    %1052 = vmatpush1.bf16.xpose.msra.mxu0 0
    %1053 = vmatprep.subr.bf16.mxu0 0
    %1054 = vmatpush1.bf16.xpose.msra.mxu0 0
    %1055 = vmatprep.subr.bf16.mxu0 0
    %1056 = vmatpush1.bf16.xpose.msra.mxu0 0
    %1057 = vmatprep.subr.bf16.mxu0 0
    %1058 = vmatpush1.bf16.xpose.msra.mxu0 0
    %1059 = vmatprep.subr.bf16.mxu0 0
    %1060 = vmatpush1.bf16.xpose.msra.mxu0 0
    %1061 = vmatprep.subr.bf16.mxu0 0
    %1062 = vmatpush1.bf16.xpose.msra.mxu0 0
    %1063 = vmatprep.subr.bf16.mxu0 0
    %1064 = vmatpush1.bf16.xpose.msra.mxu0 0
    %1065 = vmatprep.subr.bf16.mxu0 0
    %1066 = vmatpush1.bf16.xpose.msra.mxu0 0
    %1067 = vmatprep.subr.bf16.mxu0 0
    %1068 = vmatpush1.bf16.xpose.msra.mxu0 0
    %1069 = vmatprep.mubr.bf16.mxu0 0
    %1070 = vmatmul.mubr.bf16.gmra.mrb[0].mxu0 %v1032
    %v1071 = vpop.f32.mrb[0].mxu0
    %v1072 = vadd.f32 0.0, %v1071
    %v1073 = vpop.f32.mrb[0].mxu0
    %v1074 = vpop.f32.mrb[0].mxu0
    %v1075 = vpop.f32.mrb[0].mxu0
    %1076 = vdwg.mxu0
    %v1077 = vsel %vm598, %v1022, -inf
    %1078 = vmax.xlane.f32.xlu0 %v1077
    %v1079 = vpop.xlane.xlu0 %1078
    %v1080 = vsel %vm598, %v1072, -inf
    %1081 = vmax.xlane.f32.xlu0 %v1080
    %v1082 = vpop.xlane.xlu0 %1081
    %v1083 = vsub.f32 %v1022, %v1079
    %v1084 = vsub.f32 %v1072, %v1082
    %v1085 = vmul.f32 %v1083, 1.442695
    %v1086 = vpow.pop %v1085
    %v1087 = vmul.f32 %v1084, 1.442695
    %v1088 = vpow.pop %v1087
    %v1089 = vsel %vm598, %v1086, 0.0
    %1090 = vadd.xlane.f32.xlu0 %v1089
    %v1091 = vpop.xlane.xlu0 %1090
    %v1092 = vsel %vm598, %v1088, 0.0
    %1093 = vadd.xlane.f32.xlu0 %v1092
    %v1094 = vpop.xlane.xlu0 %1093
    %v1095 = vrcp.pop %v1091
    %v1096 = vrcp.pop %v1094
    %v1097 = vmul.f32 %v1086, %v1095
    %v1098 = vmul.f32 %v1088, %v1096
    %v1099 = vpack.c.bf16 %v1097, %v1097
    %v1100 = vpack.c.bf16 %v1098, %v1098
    %1101 = vrot.lane.b32.xlu0 %v623, 64
    %v1102 = vpop.permute.xlu0 %1101
    %v1104 = vsel %vm598, %v1099, 0
    %v1107 = vsel %vm628, %v1102, 0
    %1109 = vmatprep.subr.bf16.mxu0 0
    %1110 = vmatpush1.bf16.msra.mxu0 %v1107
    %1111 = vmatprep.subr.bf16.mxu0 0
    %1112 = vmatpush1.bf16.msra.mxu0 0
    %1113 = vmatprep.subr.bf16.mxu0 0
    %1114 = vmatpush1.bf16.msra.mxu0 0
    %1115 = vmatprep.subr.bf16.mxu0 0
    %1116 = vmatpush1.bf16.msra.mxu0 0
    %1117 = vmatprep.subr.bf16.mxu0 0
    %1118 = vmatpush1.bf16.msra.mxu0 0
    %1119 = vmatprep.subr.bf16.mxu0 0
    %1120 = vmatpush1.bf16.msra.mxu0 0
    %1121 = vmatprep.subr.bf16.mxu0 0
    %1122 = vmatpush1.bf16.msra.mxu0 0
    %1123 = vmatprep.subr.bf16.mxu0 0
    %1124 = vmatpush1.bf16.msra.mxu0 0
    %1125 = vmatprep.subr.bf16.mxu0 0
    %1126 = vmatpush1.bf16.msra.mxu0 0
    %1127 = vmatprep.subr.bf16.mxu0 0
    %1128 = vmatpush1.bf16.msra.mxu0 0
    %1129 = vmatprep.subr.bf16.mxu0 0
    %1130 = vmatpush1.bf16.msra.mxu0 0
    %1131 = vmatprep.subr.bf16.mxu0 0
    %1132 = vmatpush1.bf16.msra.mxu0 0
    %1133 = vmatprep.subr.bf16.mxu0 0
    %1134 = vmatpush1.bf16.msra.mxu0 0
    %1135 = vmatprep.subr.bf16.mxu0 0
    %1136 = vmatpush1.bf16.msra.mxu0 0
    %1137 = vmatprep.subr.bf16.mxu0 0
    %1138 = vmatpush1.bf16.msra.mxu0 0
    %1139 = vmatprep.subr.bf16.mxu0 0
    %1140 = vmatpush1.bf16.msra.mxu0 0
    %1141 = vmatprep.mubr.bf16.mxu0 0
    %1142 = vmatmul.mubr.bf16.gmra.mrb[0].mxu0 %v1104
    %v1143 = vpop.f32.mrb[0].mxu0
    %v1144 = vadd.f32 0.0, %v1143
    %v1145 = vpop.f32.mrb[0].mxu0
    %v1146 = vpop.f32.mrb[0].mxu0
    %v1147 = vpop.f32.mrb[0].mxu0
    %1148 = vdwg.mxu0
    %1149 = vrot.lane.b32.xlu0 %v624, 64
    %v1150 = vpop.permute.xlu0 %1149
    %v1152 = vsel %vm598, %v1100, 0
    %v1155 = vsel %vm628, %v1150, 0
    %1157 = vmatprep.subr.bf16.mxu0 0
    %1158 = vmatpush1.bf16.msra.mxu0 %v1155
    %1159 = vmatprep.subr.bf16.mxu0 0
    %1160 = vmatpush1.bf16.msra.mxu0 0
    %1161 = vmatprep.subr.bf16.mxu0 0
    %1162 = vmatpush1.bf16.msra.mxu0 0
    %1163 = vmatprep.subr.bf16.mxu0 0
    %1164 = vmatpush1.bf16.msra.mxu0 0
    %1165 = vmatprep.subr.bf16.mxu0 0
    %1166 = vmatpush1.bf16.msra.mxu0 0
    %1167 = vmatprep.subr.bf16.mxu0 0
    %1168 = vmatpush1.bf16.msra.mxu0 0
    %1169 = vmatprep.subr.bf16.mxu0 0
    %1170 = vmatpush1.bf16.msra.mxu0 0
    %1171 = vmatprep.subr.bf16.mxu0 0
    %1172 = vmatpush1.bf16.msra.mxu0 0
    %1173 = vmatprep.subr.bf16.mxu0 0
    %1174 = vmatpush1.bf16.msra.mxu0 0
    %1175 = vmatprep.subr.bf16.mxu0 0
    %1176 = vmatpush1.bf16.msra.mxu0 0
    %1177 = vmatprep.subr.bf16.mxu0 0
    %1178 = vmatpush1.bf16.msra.mxu0 0
    %1179 = vmatprep.subr.bf16.mxu0 0
    %1180 = vmatpush1.bf16.msra.mxu0 0
    %1181 = vmatprep.subr.bf16.mxu0 0
    %1182 = vmatpush1.bf16.msra.mxu0 0
    %1183 = vmatprep.subr.bf16.mxu0 0
    %1184 = vmatpush1.bf16.msra.mxu0 0
    %1185 = vmatprep.subr.bf16.mxu0 0
    %1186 = vmatpush1.bf16.msra.mxu0 0
    %1187 = vmatprep.subr.bf16.mxu0 0
    %1188 = vmatpush1.bf16.msra.mxu0 0
    %1189 = vmatprep.mubr.bf16.mxu0 0
    %1190 = vmatmul.mubr.bf16.gmra.mrb[0].mxu0 %v1152
    %v1191 = vpop.f32.mrb[0].mxu0
    %v1192 = vadd.f32 0.0, %v1191
    %v1193 = vpop.f32.mrb[0].mxu0
    %v1194 = vpop.f32.mrb[0].mxu0
    %v1195 = vpop.f32.mrb[0].mxu0
    %1196 = vdwg.mxu0
    %v1197 = vsel %vm505, %v1144, 0.0
    %v1198 = vrot.slane %v1197, 4
    %v1199 = vadd.f32 %v1197, %v1198
    %v1200 = vrot.slane %v1199, 2
    %v1201 = vadd.f32 %v1199, %v1200
    %v1202 = vrot.slane %v1201, 1
    %v1203 = vadd.f32 %v1201, %v1202
    %v1204 = vsel %vm505, %v1192, 0.0
    %v1205 = vrot.slane %v1204, 4
    %v1206 = vadd.f32 %v1204, %v1205
    %v1207 = vrot.slane %v1206, 2
    %v1208 = vadd.f32 %v1206, %v1207
    %v1209 = vrot.slane %v1208, 1
    %v1210 = vadd.f32 %v1208, %v1209
    %v1211 = vmul.f32 %v1203, %v732
    %v1212 = vmul.f32 %v1210, %v732
    %1213 = vrot.lane.b32.xlu0 %v501, 32
    %v1214 = vpop.permute.xlu0 %1213
    %1215 = vrot.lane.b32.xlu0 %v503, 32
    %v1216 = vpop.permute.xlu0 %1215
    %v1218 = vsel %vm505, %v1214, 0
    %v1221 = vsel %vm505, %v1216, 0
    %1223 = vmatprep.subr.bf16.mxu0 0
    %1224 = vmatpush1.bf16.xpose.msra.mxu0 %v1221
    %1225 = vmatprep.subr.bf16.mxu0 0
    %1226 = vmatpush1.bf16.xpose.msra.mxu0 0
    %1227 = vmatprep.subr.bf16.mxu0 0
    %1228 = vmatpush1.bf16.xpose.msra.mxu0 0
    %1229 = vmatprep.subr.bf16.mxu0 0
    %1230 = vmatpush1.bf16.xpose.msra.mxu0 0
    %1231 = vmatprep.subr.bf16.mxu0 0
    %1232 = vmatpush1.bf16.xpose.msra.mxu0 0
    %1233 = vmatprep.subr.bf16.mxu0 0
    %1234 = vmatpush1.bf16.xpose.msra.mxu0 0
    %1235 = vmatprep.subr.bf16.mxu0 0
    %1236 = vmatpush1.bf16.xpose.msra.mxu0 0
    %1237 = vmatprep.subr.bf16.mxu0 0
    %1238 = vmatpush1.bf16.xpose.msra.mxu0 0
    %1239 = vmatprep.subr.bf16.mxu0 0
    %1240 = vmatpush1.bf16.xpose.msra.mxu0 0
    %1241 = vmatprep.subr.bf16.mxu0 0
    %1242 = vmatpush1.bf16.xpose.msra.mxu0 0
    %1243 = vmatprep.subr.bf16.mxu0 0
    %1244 = vmatpush1.bf16.xpose.msra.mxu0 0
    %1245 = vmatprep.subr.bf16.mxu0 0
    %1246 = vmatpush1.bf16.xpose.msra.mxu0 0
    %1247 = vmatprep.subr.bf16.mxu0 0
    %1248 = vmatpush1.bf16.xpose.msra.mxu0 0
    %1249 = vmatprep.subr.bf16.mxu0 0
    %1250 = vmatpush1.bf16.xpose.msra.mxu0 0
    %1251 = vmatprep.subr.bf16.mxu0 0
    %1252 = vmatpush1.bf16.xpose.msra.mxu0 0
    %1253 = vmatprep.subr.bf16.mxu0 0
    %1254 = vmatpush1.bf16.xpose.msra.mxu0 0
    %1255 = vmatprep.mubr.bf16.mxu0 0
    %1256 = vmatmul.mubr.bf16.gmra.mrb[0].mxu0 %v1218
    %v1257 = vpop.f32.mrb[0].mxu0
    %v1258 = vadd.f32 0.0, %v1257
    %v1259 = vpop.f32.mrb[0].mxu0
    %v1260 = vpop.f32.mrb[0].mxu0
    %v1261 = vpop.f32.mrb[0].mxu0
    %1262 = vdwg.mxu0
    %1263 = vrot.lane.b32.xlu0 %v502, 32
    %v1264 = vpop.permute.xlu0 %1263
    %1265 = vrot.lane.b32.xlu0 %v504, 32
    %v1266 = vpop.permute.xlu0 %1265
    %v1268 = vsel %vm505, %v1264, 0
    %v1271 = vsel %vm505, %v1266, 0
    %1273 = vmatprep.subr.bf16.mxu0 0
    %1274 = vmatpush1.bf16.xpose.msra.mxu0 %v1271
    %1275 = vmatprep.subr.bf16.mxu0 0
    %1276 = vmatpush1.bf16.xpose.msra.mxu0 0
    %1277 = vmatprep.subr.bf16.mxu0 0
    %1278 = vmatpush1.bf16.xpose.msra.mxu0 0
    %1279 = vmatprep.subr.bf16.mxu0 0
    %1280 = vmatpush1.bf16.xpose.msra.mxu0 0
    %1281 = vmatprep.subr.bf16.mxu0 0
    %1282 = vmatpush1.bf16.xpose.msra.mxu0 0
    %1283 = vmatprep.subr.bf16.mxu0 0
    %1284 = vmatpush1.bf16.xpose.msra.mxu0 0
    %1285 = vmatprep.subr.bf16.mxu0 0
    %1286 = vmatpush1.bf16.xpose.msra.mxu0 0
    %1287 = vmatprep.subr.bf16.mxu0 0
    %1288 = vmatpush1.bf16.xpose.msra.mxu0 0
    %1289 = vmatprep.subr.bf16.mxu0 0
    %1290 = vmatpush1.bf16.xpose.msra.mxu0 0
    %1291 = vmatprep.subr.bf16.mxu0 0
    %1292 = vmatpush1.bf16.xpose.msra.mxu0 0
    %1293 = vmatprep.subr.bf16.mxu0 0
    %1294 = vmatpush1.bf16.xpose.msra.mxu0 0
    %1295 = vmatprep.subr.bf16.mxu0 0
    %1296 = vmatpush1.bf16.xpose.msra.mxu0 0
    %1297 = vmatprep.subr.bf16.mxu0 0
    %1298 = vmatpush1.bf16.xpose.msra.mxu0 0
    %1299 = vmatprep.subr.bf16.mxu0 0
    %1300 = vmatpush1.bf16.xpose.msra.mxu0 0
    %1301 = vmatprep.subr.bf16.mxu0 0
    %1302 = vmatpush1.bf16.xpose.msra.mxu0 0
    %1303 = vmatprep.subr.bf16.mxu0 0
    %1304 = vmatpush1.bf16.xpose.msra.mxu0 0
    %1305 = vmatprep.mubr.bf16.mxu0 0
    %1306 = vmatmul.mubr.bf16.gmra.mrb[0].mxu0 %v1268
    %v1307 = vpop.f32.mrb[0].mxu0
    %v1308 = vadd.f32 0.0, %v1307
    %v1309 = vpop.f32.mrb[0].mxu0
    %v1310 = vpop.f32.mrb[0].mxu0
    %v1311 = vpop.f32.mrb[0].mxu0
    %1312 = vdwg.mxu0
    %v1313 = vsel %vm598, %v1258, -inf
    %1314 = vmax.xlane.f32.xlu0 %v1313
    %v1315 = vpop.xlane.xlu0 %1314
    %v1316 = vsel %vm598, %v1308, -inf
    %1317 = vmax.xlane.f32.xlu0 %v1316
    %v1318 = vpop.xlane.xlu0 %1317
    %v1319 = vsub.f32 %v1258, %v1315
    %v1320 = vsub.f32 %v1308, %v1318
    %v1321 = vmul.f32 %v1319, 1.442695
    %v1322 = vpow.pop %v1321
    %v1323 = vmul.f32 %v1320, 1.442695
    %v1324 = vpow.pop %v1323
    %v1325 = vsel %vm598, %v1322, 0.0
    %1326 = vadd.xlane.f32.xlu0 %v1325
    %v1327 = vpop.xlane.xlu0 %1326
    %v1328 = vsel %vm598, %v1324, 0.0
    %1329 = vadd.xlane.f32.xlu0 %v1328
    %v1330 = vpop.xlane.xlu0 %1329
    %v1331 = vrcp.pop %v1327
    %v1332 = vrcp.pop %v1330
    %v1333 = vmul.f32 %v1322, %v1331
    %v1334 = vmul.f32 %v1324, %v1332
    %v1335 = vpack.c.bf16 %v1333, %v1333
    %v1336 = vpack.c.bf16 %v1334, %v1334
    %1337 = vrot.lane.b32.xlu0 %v623, 32
    %v1338 = vpop.permute.xlu0 %1337
    %v1340 = vsel %vm598, %v1335, 0
    %v1343 = vsel %vm628, %v1338, 0
    %1345 = vmatprep.subr.bf16.mxu0 0
    %1346 = vmatpush1.bf16.msra.mxu0 %v1343
    %1347 = vmatprep.subr.bf16.mxu0 0
    %1348 = vmatpush1.bf16.msra.mxu0 0
    %1349 = vmatprep.subr.bf16.mxu0 0
    %1350 = vmatpush1.bf16.msra.mxu0 0
    %1351 = vmatprep.subr.bf16.mxu0 0
    %1352 = vmatpush1.bf16.msra.mxu0 0
    %1353 = vmatprep.subr.bf16.mxu0 0
    %1354 = vmatpush1.bf16.msra.mxu0 0
    %1355 = vmatprep.subr.bf16.mxu0 0
    %1356 = vmatpush1.bf16.msra.mxu0 0
    %1357 = vmatprep.subr.bf16.mxu0 0
    %1358 = vmatpush1.bf16.msra.mxu0 0
    %1359 = vmatprep.subr.bf16.mxu0 0
    %1360 = vmatpush1.bf16.msra.mxu0 0
    %1361 = vmatprep.subr.bf16.mxu0 0
    %1362 = vmatpush1.bf16.msra.mxu0 0
    %1363 = vmatprep.subr.bf16.mxu0 0
    %1364 = vmatpush1.bf16.msra.mxu0 0
    %1365 = vmatprep.subr.bf16.mxu0 0
    %1366 = vmatpush1.bf16.msra.mxu0 0
    %1367 = vmatprep.subr.bf16.mxu0 0
    %1368 = vmatpush1.bf16.msra.mxu0 0
    %1369 = vmatprep.subr.bf16.mxu0 0
    %1370 = vmatpush1.bf16.msra.mxu0 0
    %1371 = vmatprep.subr.bf16.mxu0 0
    %1372 = vmatpush1.bf16.msra.mxu0 0
    %1373 = vmatprep.subr.bf16.mxu0 0
    %1374 = vmatpush1.bf16.msra.mxu0 0
    %1375 = vmatprep.subr.bf16.mxu0 0
    %1376 = vmatpush1.bf16.msra.mxu0 0
    %1377 = vmatprep.mubr.bf16.mxu0 0
    %1378 = vmatmul.mubr.bf16.gmra.mrb[0].mxu0 %v1340
    %v1379 = vpop.f32.mrb[0].mxu0
    %v1380 = vadd.f32 0.0, %v1379
    %v1381 = vpop.f32.mrb[0].mxu0
    %v1382 = vpop.f32.mrb[0].mxu0
    %v1383 = vpop.f32.mrb[0].mxu0
    %1384 = vdwg.mxu0
    %1385 = vrot.lane.b32.xlu0 %v624, 32
    %v1386 = vpop.permute.xlu0 %1385
    %v1388 = vsel %vm598, %v1336, 0
    %v1391 = vsel %vm628, %v1386, 0
    %1393 = vmatprep.subr.bf16.mxu0 0
    %1394 = vmatpush1.bf16.msra.mxu0 %v1391
    %1395 = vmatprep.subr.bf16.mxu0 0
    %1396 = vmatpush1.bf16.msra.mxu0 0
    %1397 = vmatprep.subr.bf16.mxu0 0
    %1398 = vmatpush1.bf16.msra.mxu0 0
    %1399 = vmatprep.subr.bf16.mxu0 0
    %1400 = vmatpush1.bf16.msra.mxu0 0
    %1401 = vmatprep.subr.bf16.mxu0 0
    %1402 = vmatpush1.bf16.msra.mxu0 0
    %1403 = vmatprep.subr.bf16.mxu0 0
    %1404 = vmatpush1.bf16.msra.mxu0 0
    %1405 = vmatprep.subr.bf16.mxu0 0
    %1406 = vmatpush1.bf16.msra.mxu0 0
    %1407 = vmatprep.subr.bf16.mxu0 0
    %1408 = vmatpush1.bf16.msra.mxu0 0
    %1409 = vmatprep.subr.bf16.mxu0 0
    %1410 = vmatpush1.bf16.msra.mxu0 0
    %1411 = vmatprep.subr.bf16.mxu0 0
    %1412 = vmatpush1.bf16.msra.mxu0 0
    %1413 = vmatprep.subr.bf16.mxu0 0
    %1414 = vmatpush1.bf16.msra.mxu0 0
    %1415 = vmatprep.subr.bf16.mxu0 0
    %1416 = vmatpush1.bf16.msra.mxu0 0
    %1417 = vmatprep.subr.bf16.mxu0 0
    %1418 = vmatpush1.bf16.msra.mxu0 0
    %1419 = vmatprep.subr.bf16.mxu0 0
    %1420 = vmatpush1.bf16.msra.mxu0 0
    %1421 = vmatprep.subr.bf16.mxu0 0
    %1422 = vmatpush1.bf16.msra.mxu0 0
    %1423 = vmatprep.subr.bf16.mxu0 0
    %1424 = vmatpush1.bf16.msra.mxu0 0
    %1425 = vmatprep.mubr.bf16.mxu0 0
    %1426 = vmatmul.mubr.bf16.gmra.mrb[0].mxu0 %v1388
    %v1427 = vpop.f32.mrb[0].mxu0
    %v1428 = vadd.f32 0.0, %v1427
    %v1429 = vpop.f32.mrb[0].mxu0
    %v1430 = vpop.f32.mrb[0].mxu0
    %v1431 = vpop.f32.mrb[0].mxu0
    %1432 = vdwg.mxu0
    %v1433 = vsel %vm505, %v1380, 0.0
    %v1434 = vrot.slane %v1433, 4
    %v1435 = vadd.f32 %v1433, %v1434
    %v1436 = vrot.slane %v1435, 2
    %v1437 = vadd.f32 %v1435, %v1436
    %v1438 = vrot.slane %v1437, 1
    %v1439 = vadd.f32 %v1437, %v1438
    %v1440 = vsel %vm505, %v1428, 0.0
    %v1441 = vrot.slane %v1440, 4
    %v1442 = vadd.f32 %v1440, %v1441
    %v1443 = vrot.slane %v1442, 2
    %v1444 = vadd.f32 %v1442, %v1443
    %v1445 = vrot.slane %v1444, 1
    %v1446 = vadd.f32 %v1444, %v1445
    %v1447 = vmul.f32 %v1439, %v732
    %v1448 = vmul.f32 %v1446, %v732
    %vm1451 = vcmask 1041409
    %v1452 = vsel %vm1451, %v734, %v733
    %v1456 = vsel %vm1451, %v976, %v975
    %1457 = vrot.lane.b32.xlu0 %v1456, 32
    %v1458 = vpop.permute.xlu0 %1457
    %v1462 = vsel %vm1451, %v1212, %v1211
    %1463 = vrot.lane.b32.xlu0 %v1462, 64
    %v1464 = vpop.permute.xlu0 %1463
    %v1468 = vsel %vm1451, %v1448, %v1447
    %1469 = vrot.lane.b32.xlu0 %v1468, 96
    %v1470 = vpop.permute.xlu0 %1469
    %v1472 = vsel %vm505, %v1452, %v1458
    %v1473 = vsel %vm192, %v1472, %v1464
    %vm1474 = vcmask 785408
    %v1475 = vsel %vm1474, %v1473, %v1470
    %v1476 = vpack.c.bf16 %v1475, %v1475
    %v1477 = vld [vmem:[#allocation8] sm:$0xf]
    %v1478 = vld [vmem:[#allocation8 + $0x4] sm:$0xf]
    %v1479 = vld [vmem:[#allocation8 + $0x8] sm:$0xf]
    %v1480 = vld [vmem:[#allocation8 + $0xc] sm:$0xf]
    %v1481 = vld [vmem:[#allocation8 + $0x10] sm:$0xf]
    %v1482 = vld [vmem:[#allocation8 + $0x14] sm:$0xf]
    %v1483 = vld [vmem:[#allocation8 + $0x18] sm:$0xf]
    %v1484 = vld [vmem:[#allocation8 + $0x1c] sm:$0xf]
    %v1485 = vld [vmem:[#allocation8 + $0x20] sm:$0xf]
    %v1486 = vld [vmem:[#allocation8 + $0x24] sm:$0xf]
    %v1487 = vld [vmem:[#allocation8 + $0x28] sm:$0xf]
    %v1488 = vld [vmem:[#allocation8 + $0x2c] sm:$0xf]
    %v1489 = vld [vmem:[#allocation8 + $0x30] sm:$0xf]
    %v1490 = vld [vmem:[#allocation8 + $0x34] sm:$0xf]
    %v1491 = vld [vmem:[#allocation8 + $0x38] sm:$0xf]
    %v1492 = vld [vmem:[#allocation8 + $0x3c] sm:$0xf]
    %v1493 = vld [vmem:[%s6] sm:$0x1]
    %v1495 = vlaneseq
    %v1496 = vshrl.u32 %v1495, 7
    %v1497 = vsub.s32 0, %v1496
    %v1498 = vrot.slane %v1493, %v1497
    %v1516 = vunpack.c.l.b16 %v1477
    %v1517 = vunpack.c.l.b16 %v1478
    %v1518 = vunpack.c.l.b16 %v1479
    %v1519 = vunpack.c.l.b16 %v1480
    %v1520 = vunpack.c.l.b16 %v1481
    %v1521 = vunpack.c.l.b16 %v1482
    %v1522 = vunpack.c.l.b16 %v1483
    %v1523 = vunpack.c.l.b16 %v1484
    %v1524 = vunpack.c.l.b16 %v1485
    %v1525 = vunpack.c.l.b16 %v1486
    %v1526 = vunpack.c.l.b16 %v1487
    %v1527 = vunpack.c.l.b16 %v1488
    %v1528 = vunpack.c.l.b16 %v1489
    %v1529 = vunpack.c.l.b16 %v1490
    %v1530 = vunpack.c.l.b16 %v1491
    %v1531 = vunpack.c.l.b16 %v1492
    %v1532 = vpack.c.b16 %v1517, %v1516
    %v1533 = vpack.c.b16 %v1519, %v1518
    %v1534 = vpack.c.b16 %v1521, %v1520
    %v1535 = vpack.c.b16 %v1523, %v1522
    %v1536 = vpack.c.b16 %v1525, %v1524
    %v1537 = vpack.c.b16 %v1527, %v1526
    %v1538 = vpack.c.b16 %v1529, %v1528
    %v1539 = vpack.c.b16 %v1531, %v1530
    %1548 = vmatprep.subr.bf16.mxu0 0
    %1549 = vmatpush1.bf16.msra.mxu0 %v1532
    %1550 = vmatprep.subr.bf16.mxu0 0
    %1551 = vmatpush1.bf16.msra.mxu0 %v1533
    %1552 = vmatprep.subr.bf16.mxu0 0
    %1553 = vmatpush1.bf16.msra.mxu0 %v1534
    %1554 = vmatprep.subr.bf16.mxu0 0
    %1555 = vmatpush1.bf16.msra.mxu0 %v1535
    %1556 = vmatprep.subr.bf16.mxu0 0
    %1557 = vmatpush1.bf16.msra.mxu0 %v1536
    %1558 = vmatprep.subr.bf16.mxu0 0
    %1559 = vmatpush1.bf16.msra.mxu0 %v1537
    %1560 = vmatprep.subr.bf16.mxu0 0
    %1561 = vmatpush1.bf16.msra.mxu0 %v1538
    %1562 = vmatprep.subr.bf16.mxu0 0
    %1563 = vmatpush1.bf16.msra.mxu0 %v1539
    %1564 = vmatprep.subr.bf16.mxu0 0
    %1565 = vmatpush1.bf16.msra.mxu0 0
    %1566 = vmatprep.subr.bf16.mxu0 0
    %1567 = vmatpush1.bf16.msra.mxu0 0
    %1568 = vmatprep.subr.bf16.mxu0 0
    %1569 = vmatpush1.bf16.msra.mxu0 0
    %1570 = vmatprep.subr.bf16.mxu0 0
    %1571 = vmatpush1.bf16.msra.mxu0 0
    %1572 = vmatprep.subr.bf16.mxu0 0
    %1573 = vmatpush1.bf16.msra.mxu0 0
    %1574 = vmatprep.subr.bf16.mxu0 0
    %1575 = vmatpush1.bf16.msra.mxu0 0
    %1576 = vmatprep.subr.bf16.mxu0 0
    %1577 = vmatpush1.bf16.msra.mxu0 0
    %1578 = vmatprep.subr.bf16.mxu0 0
    %1579 = vmatpush1.bf16.msra.mxu0 0
    %1580 = vmatprep.mubr.bf16.mxu0 0
    %1581 = vmatmul.mubr.bf16.gmra.mrb[0].mxu0 %v1476
    %v1582 = vpop.f32.mrb[0].mxu0
    %v1583 = vadd.f32 %v1498, %v1582
    %v1584 = vpop.f32.mrb[0].mxu0
    %v1585 = vpop.f32.mrb[0].mxu0
    %v1586 = vpop.f32.mrb[0].mxu0
    %1587 = vdwg.mxu0
    %1588 = vst [vmem:[#allocation10] sm:$0x3] %v1583
    // Predicated region
    $region46: #{tpu_custom_call.1} parent=1 // pred_check
      _
    $region47: #{tpu_custom_call.1} parent=1 // pred_check_branch
      %1590 = sbr.rel (0) target = $region49
    $region48: #{tpu_custom_call.1} parent=1 // pred_region
      %s1592 = ssub.s32 32, 32
      %1593 = vsyncadd [#allocation4], %s1592
      %s1595 = sshll.u32 [#allocation10], 4
      %s1596 = int_to_ptr.vmem [resolvable:$true] %s1595
      %1598 = dma.vmem_to_hbm [thread:$0]  %s1596, 32, %s7, [#allocation4]
    $region49: #{tpu_custom_call.1} parent=1 // pred_fallthru
      _
    // Predicated region
    $region50: #{tpu_custom_call.1} parent=1 // pred_check
      _
    $region51: #{tpu_custom_call.1} parent=1 // pred_check_branch
      %1600 = sbr.rel (0) target = $region53
    $region52: #{tpu_custom_call.1} parent=1 // pred_region
      %1601 = dma.done [#allocation4], 32
    $region53: #{tpu_custom_call.1} parent=1 // pred_fallthru
      _
    %1602 = vsyncpa [#allocation3], 1
    %1603 = vsyncpa [#allocation6], 1
    %1604 = vsyncpa [#allocation9], 1
    %1605 = vsyncpa [#allocation4], 1

</llo_original>
